<compile_context>
chip_gen: v7x
topology: tpu7x:2x2x1
jax: 0.10.0
libtpu: 0.0.40
codegen_flags: <defaults>
</compile_context>

<pallas_src>
import numpy as np
import jax
import jax.numpy as jnp
from jax import lax
from jax.experimental import pallas as pl
from jax.experimental.pallas import tpu as pltpu


# ----------------------------------------------------------------------------
# Filter design (deterministic, host-side numpy) — Butterworth bandpass 'ba'.
# Mirrors scipy.signal.iirfilter(N, Wn, btype='band', ftype='butter').
# TODO(synk): general scipy.signal.iirfilter (cheby1/cheby2/ellip/bessel,
# other btypes, analog) is host-side coefficient design and is not
# re-implemented here.
# ----------------------------------------------------------------------------
def butter_bandpass_ba(N, Wn, fs=None):
    Wn = np.asarray(Wn, dtype=np.float64)
    if fs is not None:
        Wn = 2.0 * Wn / fs
    # Analog Butterworth lowpass prototype (zpk).
    m = np.arange(-N + 1, N, 2)
    p = -np.exp(1j * np.pi * m / (2.0 * N))
    z = np.array([], dtype=complex)
    k = 1.0
    # Pre-warp critical frequencies (digital design, fs=2 half-cycles/sample).
    fs_d = 2.0
    warped = 2.0 * fs_d * np.tan(np.pi * Wn / fs_d)
    bw = warped[1] - warped[0]
    wo = np.sqrt(warped[0] * warped[1])
    # lp2bp_zpk
    degree = len(p) - len(z)
    z_lp = z * bw / 2.0
    p_lp = p * bw / 2.0
    z_bp = np.concatenate([z_lp + np.sqrt(z_lp**2 - wo**2),
                           z_lp - np.sqrt(z_lp**2 - wo**2)])
    p_bp = np.concatenate([p_lp + np.sqrt(p_lp**2 - wo**2),
                           p_lp - np.sqrt(p_lp**2 - wo**2)])
    z_bp = np.append(z_bp, np.zeros(degree))
    k_bp = k * bw**degree
    # bilinear_zpk
    fs2 = 2.0 * fs_d
    degree2 = len(p_bp) - len(z_bp)
    z_z = (fs2 + z_bp) / (fs2 - z_bp)
    p_z = (fs2 + p_bp) / (fs2 - p_bp)
    z_z = np.append(z_z, -np.ones(degree2))
    k_z = k_bp * np.real(np.prod(fs2 - z_bp) / np.prod(fs2 - p_bp))
    # zpk2tf
    b = np.real(k_z * np.poly(z_z))
    a = np.real(np.poly(p_z))
    return b, a


# ----------------------------------------------------------------------------
# Host-side construction of the block-recursion operators (float64).
#
# Forward pass (lfilter), block of L samples, carried state = last TAIL
# inputs/outputs of the previous block (forward time order):
#     y_blk = M_x @ x_blk + M_xt @ x_tail + M_yt @ y_tail
# Backward pass (lfilter on the reversed signal, expressed in forward time
# order so no flips are needed in-kernel); carried state = first TAIL samples
# of the *next* (later-in-time) block:
#     z_blk = Mb_x @ y1_blk + Mb_xt @ y1_next_tail + Mb_zt @ z_next_tail
# Matrices are returned transposed for the batch-major (B, T) kernel layout,
# i.e. the kernel computes  row_block @ M^T.
# ----------------------------------------------------------------------------
def build_block_matrices(b, a, L, TAIL):
    b = np.asarray(b, np.float64)
    a = np.asarray(a, np.float64)
    b = b / a[0]
    a = a / a[0]
    nb, na = len(b), len(a)
    assert TAIL >= max(nb - 1, na - 1) and L >= TAIL

    K = TAIL + L + TAIL
    E = np.eye(K, dtype=np.float64)

    # ---- forward lfilter block operator ----
    x_ext = np.zeros((TAIL + L, K))
    x_ext[:TAIL, :] = E[:TAIL, :]              # x_tail  (x[n0-TAIL .. n0-1])
    x_ext[TAIL:, :] = E[TAIL:TAIL + L, :]      # x_blk   (x[n0 .. n0+L-1])
    y_ext = np.zeros((TAIL + L, K))
    y_ext[:TAIL, :] = E[TAIL + L:, :]          # y_tail  (y[n0-TAIL .. n0-1])
    for i in range(L):
        n = TAIL + i
        acc = np.zeros(K)
        for j in range(nb):
            acc += b[j] * x_ext[n - j]
        for m in range(1, na):
            acc -= a[m] * y_ext[n - m]
        y_ext[n] = acc
    Mf = y_ext[TAIL:, :]                       # (L, K)
    M_xt, M_x, M_yt = Mf[:, :TAIL], Mf[:, TAIL:TAIL + L], Mf[:, TAIL + L:]

    # ---- backward (time-reversed) lfilter block operator, forward layout ----
    y1_ext = np.zeros((L + TAIL, K))
    z_ext = np.zeros((L + TAIL, K))
    y1_ext[L:, :] = E[:TAIL, :]                # y1[n0+L .. n0+L+TAIL-1]
    y1_ext[:L, :] = E[TAIL:TAIL + L, :]        # y1[n0 .. n0+L-1]
    z_ext[L:, :] = E[TAIL + L:, :]             # z[n0+L .. n0+L+TAIL-1]
    for t in range(L - 1, -1, -1):
        acc = np.zeros(K)
        for j in range(nb):
            acc += b[j] * y1_ext[t + j]
        for m in range(1, na):
            acc -= a[m] * z_ext[t + m]
        z_ext[t] = acc
    Mb = z_ext[:L, :]                          # (L, K)
    Mb_xt, Mb_x, Mb_zt = Mb[:, :TAIL], Mb[:, TAIL:TAIL + L], Mb[:, TAIL + L:]

    # Transposed for batch-major (rows = waveforms) kernel layout.
    return (M_x.T, M_xt.T, M_yt.T, Mb_x.T, Mb_xt.T, Mb_zt.T)


# ----------------------------------------------------------------------------
# Pallas kernel: one blocked lfilter pass (forward or time-reversed), with the
# time-block loop on the grid and the carried state in persistent VMEM scratch.
# ----------------------------------------------------------------------------
def make_pass_kernel(L, TAIL, reverse):
    def kernel(x_ref, m_blk_ref, m_xt_ref, m_yt_ref, o_ref, xt_sc, yt_sc):
        j = pl.program_id(1)

        # Zero initial conditions at the start of every batch tile's time sweep.
        @pl.when(j == 0)
        def _():
            xt_sc[...] = jnp.zeros_like(xt_sc)
            yt_sc[...] = jnp.zeros_like(yt_sc)

        x_blk = x_ref[...]
        y_blk = (
            jnp.dot(x_blk, m_blk_ref[...],
                    preferred_element_type=jnp.float32,
                    precision=lax.Precision.HIGHEST)
            + jnp.dot(xt_sc[...], m_xt_ref[...],
                      preferred_element_type=jnp.float32,
                      precision=lax.Precision.HIGHEST)
            + jnp.dot(yt_sc[...], m_yt_ref[...],
                      preferred_element_type=jnp.float32,
                      precision=lax.Precision.HIGHEST)
        )
        o_ref[...] = y_blk

        # Full-128-lane, lane-aligned tail carry (no masked cross-lane moves).
        if reverse:
            xt_sc[...] = x_blk[:, :TAIL]
            yt_sc[...] = y_blk[:, :TAIL]
        else:
            xt_sc[...] = x_blk[:, L - TAIL:]
            yt_sc[...] = y_blk[:, L - TAIL:]

    return kernel


def _run_pass(x, m_blk, m_xt, m_yt, *, L, TAIL, Bt, reverse):
    Bpad, T = x.shape
    nbt = Bpad // Bt
    nblk = T // L
    if reverse:
        time_map = lambda i, j: (i, nblk - 1 - j)     # walk time blocks backwards
    else:
        time_map = lambda i, j: (i, j)

    return pl.pallas_call(
        make_pass_kernel(L, TAIL, reverse),
        out_shape=jax.ShapeDtypeStruct((Bpad, T), jnp.float32),
        grid=(nbt, nblk),
        in_specs=[
            pl.BlockSpec((Bt, L), time_map),              # signal block
            pl.BlockSpec((L, L), lambda i, j: (0, 0)),    # M^T      (constant)
            pl.BlockSpec((TAIL, L), lambda i, j: (0, 0)),  # M_xt^T  (constant)
            pl.BlockSpec((TAIL, L), lambda i, j: (0, 0)),  # M_yt^T  (constant)
        ],
        out_specs=pl.BlockSpec((Bt, L), time_map),
        scratch_shapes=[
            pltpu.VMEM((Bt, TAIL), jnp.float32),   # carried input tail
            pltpu.VMEM((Bt, TAIL), jnp.float32),   # carried output tail
        ],
        compiler_params=pltpu.CompilerParams(
            dimension_semantics=("parallel", "arbitrary")),
    )(x, m_blk, m_xt, m_yt)


# ----------------------------------------------------------------------------
# Tiling heuristics (generation-aware).
# ----------------------------------------------------------------------------
def _round_up(n, m):
    return ((n + m - 1) // m) * m


def _tpu_generation_defaults():
    """(preferred block length L, batch-tile target) for the local TPU."""
    kind = ""
    try:
        kind = jax.devices()[0].device_kind.lower()
    except Exception:
        pass
    if "v6" in kind or "v7" in kind:
        # 2x256^2 MXU: a 256x256 operator is exactly one native weight tile.
        return 256, 256
    # v5e and older: 128x128 MXU tiles; L=256 would double per-sample MACs.
    return 128, 128


def _choose_block_len(T, order, preferred):
    if order > 128:
        raise ValueError("filter order too high for the 128-wide tail carry")
    for L in (c for c in (256, 128) if c <= preferred):
        if T >= L and T % L == 0:
            return L
    # TODO(synk): support arbitrary n_samples via a distinct remainder-block
    # operator; currently n_samples must be a multiple of 128.
    raise ValueError(f"n_samples={T} must be a multiple of 128")


def _choose_batch_tile(Bw, target):
    bt = min(target, _round_up(Bw, 8))
    # Prefer >=2 tiles on the "parallel" batch axis so both v7x TensorCores
    # (and v5e/v6e megacore scheduling) get work when the batch allows it.
    if Bw > 8 and -(-Bw // bt) < 2:
        bt = max(8, _round_up(-(-Bw // 2), 8))
    return bt


# ----------------------------------------------------------------------------
# Public entry point: filtfilt(x, a, b, clamp=False) for batched waveforms.
# ----------------------------------------------------------------------------
def iir_filtfilt_pallas(x, b, a):
    """x: (n_waveforms, n_samples) -> filtfilt(x, a, b, clamp=False), float32."""
    x = jnp.asarray(x, jnp.float32)
    Bw, T = x.shape

    b = np.asarray(b, np.float64)
    a = np.asarray(a, np.float64)
    order = max(len(b) - 1, len(a) - 1)

    L_pref, Bt_target = _tpu_generation_defaults()
    L = _choose_block_len(T, order, L_pref)
    TAIL = min(128, L)

    mats = [jnp.asarray(m, jnp.float32)
            for m in build_block_matrices(b, a, L, TAIL)]
    Mx, Mxt, Myt, Mbx, Mbxt, Mbzt = mats

    Bt = _choose_batch_tile(Bw, Bt_target)
    nbt = -(-Bw // Bt)
    Bpad = nbt * Bt
    xp = x if Bpad == Bw else jnp.pad(x, ((0, Bpad - Bw), (0, 0)))

    y1 = _run_pass(xp, Mx, Mxt, Myt, L=L, TAIL=TAIL, Bt=Bt, reverse=False)
    y2 = _run_pass(y1, Mbx, Mbxt, Mbzt, L=L, TAIL=TAIL, Bt=Bt, reverse=True)
    return y2[:Bw]


# ----------------------------------------------------------------------------
# Pure numpy reference (zero-initial-condition lfilter, forward-backward).
# ----------------------------------------------------------------------------
def lfilter_np(x, b, a):
    b = np.asarray(b, np.float64) / a[0]
    a = np.asarray(a, np.float64) / a[0]
    Bw, T = x.shape
    y = np.zeros((Bw, T), np.float64)
    for n in range(T):
        acc = np.zeros(Bw, np.float64)
        for j in range(len(b)):
            if n - j >= 0:
                acc += b[j] * x[:, n - j]
        for k in range(1, len(a)):
            if n - k >= 0:
                acc -= a[k] * y[:, n - k]
        y[:, n] = acc
    return y


def filtfilt_np(x, b, a):
    y = lfilter_np(np.asarray(x, np.float64), b, a)
    y = lfilter_np(y[:, ::-1], b, a)[:, ::-1]
    return y


if __name__ == "__main__":
    # IIRFilter(N=2, Wn=[0.1, 0.3], btype='band', ftype='butter')
    N = 2
    Wn = [0.1, 0.3]
    b_coef, a_coef = butter_bandpass_ba(N, Wn)

    # Small deterministic batch of waveforms: (n_waveforms, n_samples).
    key = jax.random.PRNGKey(0)
    x = jax.random.normal(key, (8, 512), dtype=jnp.float32)

    out = iir_filtfilt_pallas(x, b_coef, a_coef)
    out = jax.block_until_ready(out)

    ref = filtfilt_np(np.asarray(x), b_coef, a_coef)
    np.testing.assert_allclose(np.asarray(out), ref, rtol=2e-3, atol=2e-3)

    print("KERNEL_OK")
</pallas_src>

<mosaic_0001>
module attributes {stable_mosaic.version = 11 : i64} {
  func.func @kernel(%arg0: i32, %arg1: i32, %arg2: memref<8x128xf32, #tpu.memory_space<vmem>>, %arg3: memref<128x128xf32, #tpu.memory_space<vmem>>, %arg4: memref<128x128xf32, #tpu.memory_space<vmem>>, %arg5: memref<128x128xf32, #tpu.memory_space<vmem>>, %arg6: memref<8x128xf32, #tpu.memory_space<vmem>>, %arg7: memref<8x128xf32, #tpu.memory_space<vmem>>, %arg8: memref<8x128xf32, #tpu.memory_space<vmem>>) attributes {dimension_semantics = [#tpu.dimension_semantics<parallel>, #tpu.dimension_semantics<arbitrary>], iteration_bounds = array<i64: 1, 4>, scalar_prefetch = 0 : i64, scratch_operands = 2 : i64, tpu.core_type = #tpu.core_type<tc>, window_params = [{transform_indices = @transform_0, window_bounds = array<i64: 8, 128>}, {pipeline_mode = #tpu.pipeline_mode<synchronous>, transform_indices = @transform_1, window_bounds = array<i64: 128, 128>}, {pipeline_mode = #tpu.pipeline_mode<synchronous>, transform_indices = @transform_2, window_bounds = array<i64: 128, 128>}, {pipeline_mode = #tpu.pipeline_mode<synchronous>, transform_indices = @transform_3, window_bounds = array<i64: 128, 128>}, {transform_indices = @transform_4, window_bounds = array<i64: 8, 128>}]} {
    %c0_i32 = arith.constant 0 : i32
    %0 = arith.cmpi eq, %arg1, %c0_i32 : i32
    %1 = arith.extui %0 : i1 to i32
    %c0_i32_0 = arith.constant 0 : i32
    %2 = arith.cmpi ne, %1, %c0_i32_0 : i32
    scf.if %2 {
      %cst_20 = arith.constant 0.000000e+00 : f32
      %17 = vector.broadcast %cst_20 : f32 to vector<8x128xf32>
      %c0_21 = arith.constant 0 : index
      %c0_22 = arith.constant 0 : index
      %18 = vector.load %arg7[%c0_21, %c0_22] : memref<8x128xf32, #tpu.memory_space<vmem>>, vector<8x128xf32>
      tpu.vector_store %arg7[%c0_21, %c0_22], %17 {strides = array<i32>} : memref<8x128xf32, #tpu.memory_space<vmem>>, vector<8x128xf32>,
      %cst_23 = arith.constant 0.000000e+00 : f32
      %19 = vector.broadcast %cst_23 : f32 to vector<8x128xf32>
      %c0_24 = arith.constant 0 : index
      %c0_25 = arith.constant 0 : index
      %20 = vector.load %arg8[%c0_24, %c0_25] : memref<8x128xf32, #tpu.memory_space<vmem>>, vector<8x128xf32>
      tpu.vector_store %arg8[%c0_24, %c0_25], %19 {strides = array<i32>} : memref<8x128xf32, #tpu.memory_space<vmem>>, vector<8x128xf32>,
    } else {
    }
    %c0 = arith.constant 0 : index
    %c0_1 = arith.constant 0 : index
    %3 = vector.load %arg2[%c0, %c0_1] : memref<8x128xf32, #tpu.memory_space<vmem>>, vector<8x128xf32>
    %c0_2 = arith.constant 0 : index
    %c0_3 = arith.constant 0 : index
    %4 = vector.load %arg3[%c0_2, %c0_3] : memref<128x128xf32, #tpu.memory_space<vmem>>, vector<128x128xf32>
    %cst = arith.constant dense<0.000000e+00> : vector<8x128xf32>
    %5 = tpu.matmul %3, %4, %cst {dimension_numbers = #tpu.dot_dimension_numbers<[1], [0], [0], [1], [0, 0, 1, 1], [], []>, precision = #tpu.contract_precision<fp32>} : vector<8x128xf32>, vector<128x128xf32>, vector<8x128xf32> -> vector<8x128xf32>
    %c0_4 = arith.constant 0 : index
    %c0_5 = arith.constant 0 : index
    %6 = vector.load %arg7[%c0_4, %c0_5] : memref<8x128xf32, #tpu.memory_space<vmem>>, vector<8x128xf32>
    %c0_6 = arith.constant 0 : index
    %c0_7 = arith.constant 0 : index
    %7 = vector.load %arg4[%c0_6, %c0_7] : memref<128x128xf32, #tpu.memory_space<vmem>>, vector<128x128xf32>
    %cst_8 = arith.constant dense<0.000000e+00> : vector<8x128xf32>
    %8 = tpu.matmul %6, %7, %cst_8 {dimension_numbers = #tpu.dot_dimension_numbers<[1], [0], [0], [1], [0, 0, 1, 1], [], []>, precision = #tpu.contract_precision<fp32>} : vector<8x128xf32>, vector<128x128xf32>, vector<8x128xf32> -> vector<8x128xf32>
    %9 = arith.addf %5, %8 : vector<8x128xf32>
    %c0_9 = arith.constant 0 : index
    %c0_10 = arith.constant 0 : index
    %10 = vector.load %arg8[%c0_9, %c0_10] : memref<8x128xf32, #tpu.memory_space<vmem>>, vector<8x128xf32>
    %c0_11 = arith.constant 0 : index
    %c0_12 = arith.constant 0 : index
    %11 = vector.load %arg5[%c0_11, %c0_12] : memref<128x128xf32, #tpu.memory_space<vmem>>, vector<128x128xf32>
    %cst_13 = arith.constant dense<0.000000e+00> : vector<8x128xf32>
    %12 = tpu.matmul %10, %11, %cst_13 {dimension_numbers = #tpu.dot_dimension_numbers<[1], [0], [0], [1], [0, 0, 1, 1], [], []>, precision = #tpu.contract_precision<fp32>} : vector<8x128xf32>, vector<128x128xf32>, vector<8x128xf32> -> vector<8x128xf32>
    %13 = arith.addf %9, %12 : vector<8x128xf32>
    %c0_14 = arith.constant 0 : index
    %c0_15 = arith.constant 0 : index
    %14 = vector.load %arg6[%c0_14, %c0_15] : memref<8x128xf32, #tpu.memory_space<vmem>>, vector<8x128xf32>
    tpu.vector_store %arg6[%c0_14, %c0_15], %13 {strides = array<i32>} : memref<8x128xf32, #tpu.memory_space<vmem>>, vector<8x128xf32>,
    %c0_16 = arith.constant 0 : index
    %c0_17 = arith.constant 0 : index
    %15 = vector.load %arg7[%c0_16, %c0_17] : memref<8x128xf32, #tpu.memory_space<vmem>>, vector<8x128xf32>
    tpu.vector_store %arg7[%c0_16, %c0_17], %3 {strides = array<i32>} : memref<8x128xf32, #tpu.memory_space<vmem>>, vector<8x128xf32>,
    %c0_18 = arith.constant 0 : index
    %c0_19 = arith.constant 0 : index
    %16 = vector.load %arg8[%c0_18, %c0_19] : memref<8x128xf32, #tpu.memory_space<vmem>>, vector<8x128xf32>
    tpu.vector_store %arg8[%c0_18, %c0_19], %13 {strides = array<i32>} : memref<8x128xf32, #tpu.memory_space<vmem>>, vector<8x128xf32>,
    return
  }
  func.func @transform_0(%arg0: i32, %arg1: i32) -> (i32, i32) {
    %c0_i32 = arith.constant 0 : i32
    return %arg0, %arg1 : i32, i32
  }
  func.func @transform_1(%arg0: i32, %arg1: i32) -> (i32, i32) {
    %c0_i32 = arith.constant 0 : i32
    %c0_i32_0 = arith.constant 0 : i32
    %c0_i32_1 = arith.constant 0 : i32
    return %c0_i32, %c0_i32_0 : i32, i32
  }
  func.func @transform_2(%arg0: i32, %arg1: i32) -> (i32, i32) {
    %c0_i32 = arith.constant 0 : i32
    %c0_i32_0 = arith.constant 0 : i32
    %c0_i32_1 = arith.constant 0 : i32
    return %c0_i32, %c0_i32_0 : i32, i32
  }
  func.func @transform_3(%arg0: i32, %arg1: i32) -> (i32, i32) {
    %c0_i32 = arith.constant 0 : i32
    %c0_i32_0 = arith.constant 0 : i32
    %c0_i32_1 = arith.constant 0 : i32
    return %c0_i32, %c0_i32_0 : i32, i32
  }
  func.func @transform_4(%arg0: i32, %arg1: i32) -> (i32, i32) {
    %c0_i32 = arith.constant 0 : i32
    return %arg0, %arg1 : i32, i32
  }
}

</mosaic_0001>

<llo_original>
// kernel: tpu_custom_call.1
$region0: #{tpu_custom_call.1}
  #allocation0 [shape = 'u32[]', space=smem, size = 0x4, offset = 0x4, fixed_abs, tag = 'smem constant byte address 0x4 - core index']
  #allocation1 [shape = 'u32[144,128]{1,0:T(1,128)}', space=vmem, size = 0x12000, scoped, tag = 'internal scratch']
  #allocation2 [shape = 'f32[8,128]{1,0:T(8,128)}', space=vmem, size = 0x1000, scoped, tag = 'scratch operand']
  #allocation3 [shape = 'f32[8,128]{1,0:T(8,128)}', space=vmem, size = 0x1000, scoped, tag = 'scratch operand']
  %s0 = inlined_call_operand.hbm [shape: f32[8,512], index: 0, kind: input, shape index: {}]
  %s1 = inlined_call_operand.hbm [shape: f32[128,128], index: 1, kind: input, shape index: {}]
  %s2 = inlined_call_operand.hbm [shape: f32[128,128], index: 2, kind: input, shape index: {}]
  %s3 = inlined_call_operand.hbm [shape: f32[128,128], index: 3, kind: input, shape index: {}]
  %s4 = inlined_call_operand.hbm [shape: f32[8,512], index: 4, kind: output, shape index: {}]
  %s5 = sld [smem:[#allocation0]]
  $region69: #{tpu_custom_call.1} parent=0
    _
  %s7 = ssub.s32 1, %s5
  %s8 = scalar_select 0, %s7, %s5
  $region1: #{tpu_custom_call.1} parent=0
    #allocation4 [shape = 'u8[8192]{0}', space=vmem, size = 0x2000, scoped, tag = 'input window, operand 0']
    #allocation5 [shape = 's32[2]{0}', space=sflag, size = 0x8, scoped, tag = 'scoped memory for tpu_custom_call.1']
    #allocation6 [shape = 's32[2]{0}', space=sflag, size = 0x8, scoped, tag = 'scoped memory for tpu_custom_call.1']
    #allocation7 [shape = 'u8[65536]{0}', space=vmem, size = 0x10000, scoped, tag = 'input window, operand 1, single buffered']
    #allocation8 [shape = 's32[1]{0}', space=sflag, size = 0x4, scoped, tag = 'scoped memory for tpu_custom_call.1']
    #allocation9 [shape = 'u8[65536]{0}', space=vmem, size = 0x10000, scoped, tag = 'input window, operand 2, single buffered']
    #allocation10 [shape = 'u8[65536]{0}', space=vmem, size = 0x10000, scoped, tag = 'input window, operand 3, single buffered']
    #allocation11 [shape = 's32[1]{0}', space=sflag, size = 0x4, scoped, tag = 'scoped memory for tpu_custom_call.1']
    #allocation12 [shape = 'u8[8192]{0}', space=vmem, size = 0x2000, scoped, tag = 'output window, operand 0']
    %9 = vsyncpa [#allocation5], 0
    %s10 = scalar_lea.sflag [#allocation5], 1
    %11 = vsyncpa %s10, 0
    %12 = vsyncpa [#allocation8], 0
    %13 = vsyncpa [#allocation11], 0
    %14 = vsyncpa [#allocation6], 0
    %s15 = scalar_lea.sflag [#allocation6], 1
    %16 = vsyncpa %s15, 0
    loop: start=0, step=1, limit=6
    $region2: #{tpu_custom_call.1} parent=1 // loop_pre_header
      _
    $region3: #{tpu_custom_call.1} parent=1 // loop_header
      %s18 = sphi 0, %s22
      %p19 = scmp.ge.s32.totalorder %s18, 6
      %s25 = sphi 0, %s37
      %s26 = sphi 0, %s33
      %s27 = sphi 0, %s25
      %s28 = sphi 0, %s26
      %s29 = sphi 0, %s27
      %s30 = sphi 0, %s28
      %s42 = sphi 0, %s44
      %s45 = sphi 0, %s42
      %s46 = sphi 0, %s45
      %s62 = sphi 0, %s46
      %s66 = sphi 0, %s66
      %s68 = sphi 0, %s66
      %s69 = sphi 0, %s68
      %s83 = sphi 0, %s69
      %s87 = sphi 0, %s87
      %s89 = sphi 0, %s87
      %s90 = sphi 0, %s89
      %s104 = sphi 0, %s90
      %s108 = sphi 0, %s108
      %s110 = sphi 0, %s108
      %s111 = sphi 0, %s110
      %s125 = sphi 0, %s111
      %s133 = sphi 0, %s135
      %s136 = sphi 0, %s133
      %s137 = sphi 0, %s136
      %s153 = sphi 0, %s137
    $region4: #{tpu_custom_call.1} parent=1 // loop_header_branch
      %21 = sbr.rel (%p19) target = $region8
    $region5: #{tpu_custom_call.1} parent=1 // loop_body
      %s23 = ssub.s32 %s18, 1
      %s24 = ssub.s32 %s18, 2
      %s31 = sadd.s32 1, %s26
      %p32 = scmp.ge.s32.totalorder %s31, 4
      %s33 = scalar_select %p32, 0, %s31
      %s34 = sadd.s32 1, %s25
      %s35 = scalar_select %p32, %s34, %s25
      %p36 = scmp.ge.s32.totalorder %s35, 1
      %s37 = scalar_select %p36, 0, %s35
      %s38 = ssub.s32 %s25, %s37
      %s39 = ssub.s32 %s26, %s33
      %s40 = sor.u32 %s38, %s39
      %p41 = scmp.eq.s32.totalorder %s40, 0
      %s43 = sadd.s32 %s42, 1
      %s44 = scalar_select %p41, %s42, %s43
      %p47 = pneg %p41
      %p48 = scmp.eq.s32.totalorder %s18, 3
      %p49 = por %p47, %p48
      %p50 = scmp.ne.s32.totalorder %s42, %s45
      %p51 = scmp.eq.s32.totalorder %s18, 0
      %p52 = por %p50, %p51
      %p53 = scmp.ne.s32.totalorder %s42, %s45
      %p54 = scmp.eq.s32.totalorder %s23, 3
      %p55 = por %p53, %p54
      %p56 = scmp.ne.s32.totalorder %s45, %s46
      %p57 = scmp.eq.s32.totalorder %s23, 0
      %p58 = por %p56, %p57
      %p59 = scmp.ne.s32.totalorder %s45, %s46
      %p60 = scmp.eq.s32.totalorder %s24, 3
      %p61 = por %p59, %p60
      %p63 = scmp.ne.s32.totalorder %s46, %s62
      %p64 = scmp.eq.s32.totalorder %s24, 0
      %p65 = por %p63, %p64
      %s67 = sadd.s32 %s66, 1
      %p70 = scmp.eq.s32.totalorder %s18, 3
      %p71 = scmp.ne.s32.totalorder %s66, %s68
      %p72 = scmp.eq.s32.totalorder %s18, 0
      %p73 = por %p71, %p72
      %p74 = scmp.ne.s32.totalorder %s66, %s68
      %p75 = scmp.eq.s32.totalorder %s23, 3
      %p76 = por %p74, %p75
      %p77 = scmp.ne.s32.totalorder %s68, %s69
      %p78 = scmp.eq.s32.totalorder %s23, 0
      %p79 = por %p77, %p78
      %p80 = scmp.ne.s32.totalorder %s68, %s69
      %p81 = scmp.eq.s32.totalorder %s24, 3
      %p82 = por %p80, %p81
      %p84 = scmp.ne.s32.totalorder %s69, %s83
      %p85 = scmp.eq.s32.totalorder %s24, 0
      %p86 = por %p84, %p85
      %s88 = sadd.s32 %s87, 1
      %p91 = scmp.eq.s32.totalorder %s18, 3
      %p92 = scmp.ne.s32.totalorder %s87, %s89
      %p93 = scmp.eq.s32.totalorder %s18, 0
      %p94 = por %p92, %p93
      %p95 = scmp.ne.s32.totalorder %s87, %s89
      %p96 = scmp.eq.s32.totalorder %s23, 3
      %p97 = por %p95, %p96
      %p98 = scmp.ne.s32.totalorder %s89, %s90
      %p99 = scmp.eq.s32.totalorder %s23, 0
      %p100 = por %p98, %p99
      %p101 = scmp.ne.s32.totalorder %s89, %s90
      %p102 = scmp.eq.s32.totalorder %s24, 3
      %p103 = por %p101, %p102
      %p105 = scmp.ne.s32.totalorder %s90, %s104
      %p106 = scmp.eq.s32.totalorder %s24, 0
      %p107 = por %p105, %p106
      %s109 = sadd.s32 %s108, 1
      %p112 = scmp.eq.s32.totalorder %s18, 3
      %p113 = scmp.ne.s32.totalorder %s108, %s110
      %p114 = scmp.eq.s32.totalorder %s18, 0
      %p115 = por %p113, %p114
      %p116 = scmp.ne.s32.totalorder %s108, %s110
      %p117 = scmp.eq.s32.totalorder %s23, 3
      %p118 = por %p116, %p117
      %p119 = scmp.ne.s32.totalorder %s110, %s111
      %p120 = scmp.eq.s32.totalorder %s23, 0
      %p121 = por %p119, %p120
      %p122 = scmp.ne.s32.totalorder %s110, %s111
      %p123 = scmp.eq.s32.totalorder %s24, 3
      %p124 = por %p122, %p123
      %p126 = scmp.ne.s32.totalorder %s111, %s125
      %p127 = scmp.eq.s32.totalorder %s24, 0
      %p128 = por %p126, %p127
      %s129 = ssub.s32 %s25, %s37
      %s130 = ssub.s32 %s26, %s33
      %s131 = sor.u32 %s129, %s130
      %p132 = scmp.eq.s32.totalorder %s131, 0
      %s134 = sadd.s32 %s133, 1
      %s135 = scalar_select %p132, %s133, %s134
      %p138 = pneg %p132
      %p139 = scmp.eq.s32.totalorder %s18, 3
      %p140 = por %p138, %p139
      %p141 = scmp.ne.s32.totalorder %s133, %s136
      %p142 = scmp.eq.s32.totalorder %s18, 0
      %p143 = por %p141, %p142
      %p144 = scmp.ne.s32.totalorder %s133, %s136
      %p145 = scmp.eq.s32.totalorder %s23, 3
      %p146 = por %p144, %p145
      %p147 = scmp.ne.s32.totalorder %s136, %s137
      %p148 = scmp.eq.s32.totalorder %s23, 0
      %p149 = por %p147, %p148
      %p150 = scmp.ne.s32.totalorder %s136, %s137
      %p151 = scmp.eq.s32.totalorder %s24, 3
      %p152 = por %p150, %p151
      %p154 = scmp.ne.s32.totalorder %s137, %s153
      %p155 = scmp.eq.s32.totalorder %s24, 0
      %p156 = por %p154, %p155
      %p157 = scmp.le.s32.totalorder 1, %s18
      %p158 = scmp.lt.s32.totalorder %s18, 5
      %p159 = pnand %p157, %p158
      %p160 = pneg %p159
      // Predicated region
      $region9: #{tpu_custom_call.1} parent=5 // pred_check
        _
      $region10: #{tpu_custom_call.1} parent=5 // pred_check_branch
        %162 = sbr.rel (%p159) target = $region12
      $region11: #{tpu_custom_call.1} parent=5 // pred_region
        %s163 = ssub.s32 %s18, 1
        // Predicated region
        $region13: #{tpu_custom_call.1} parent=11 // pred_check
          %p164 = pneg %p79
        $region14: #{tpu_custom_call.1} parent=11 // pred_check_branch
          %166 = sbr.rel (%p164) target = $region16
        $region15: #{tpu_custom_call.1} parent=11 // pred_region
          %s168 = ssub.s32 2048, 2048
          %169 = vsyncadd [#allocation8], %s168
          %s170 = sshll.u32 [#allocation7], 4
          %s171 = int_to_ptr.vmem [resolvable:$true] %s170
          %176 = dma.hbm_to_vmem [thread:$0]  %s1, 2048, %s171, [#allocation8], 128, 128, 8
        $region16: #{tpu_custom_call.1} parent=11 // pred_fallthru
          _
        // Predicated region
        $region17: #{tpu_custom_call.1} parent=11 // pred_check
          %p177 = pneg %p100
        $region18: #{tpu_custom_call.1} parent=11 // pred_check_branch
          %179 = sbr.rel (%p177) target = $region20
        $region19: #{tpu_custom_call.1} parent=11 // pred_region
          %s181 = ssub.s32 2048, 2048
          %182 = vsyncadd [#allocation8], %s181
          %s183 = sshll.u32 [#allocation9], 4
          %s184 = int_to_ptr.vmem [resolvable:$true] %s183
          %189 = dma.hbm_to_vmem [thread:$0]  %s2, 2048, %s184, [#allocation8], 128, 128, 8
        $region20: #{tpu_custom_call.1} parent=11 // pred_fallthru
          _
        // Predicated region
        $region21: #{tpu_custom_call.1} parent=11 // pred_check
          %p190 = pneg %p121
        $region22: #{tpu_custom_call.1} parent=11 // pred_check_branch
          %192 = sbr.rel (%p190) target = $region24
        $region23: #{tpu_custom_call.1} parent=11 // pred_region
          %s194 = ssub.s32 2048, 2048
          %195 = vsyncadd [#allocation11], %s194
          %s196 = sshll.u32 [#allocation10], 4
          %s197 = int_to_ptr.vmem [resolvable:$true] %s196
          %202 = dma.hbm_to_vmem [thread:$0]  %s3, 2048, %s197, [#allocation11], 128, 128, 8
        $region24: #{tpu_custom_call.1} parent=11 // pred_fallthru
          _
      $region12: #{tpu_custom_call.1} parent=5 // pred_fallthru
        _
      %p203 = scmp.lt.s32.totalorder %s18, 4
      // Predicated region
      $region25: #{tpu_custom_call.1} parent=5 // pred_check
        %p204 = pneg %p203
      $region26: #{tpu_custom_call.1} parent=5 // pred_check_branch
        %206 = sbr.rel (%p204) target = $region28
      $region27: #{tpu_custom_call.1} parent=5 // pred_region
        // Predicated region
        $region29: #{tpu_custom_call.1} parent=27 // pred_check
          %p207 = pneg %p52
        $region30: #{tpu_custom_call.1} parent=27 // pred_check_branch
          %209 = sbr.rel (%p207) target = $region32
        $region31: #{tpu_custom_call.1} parent=27 // pred_region
          %s210 = sand.u32 %s42, 1
          %s211 = scalar_lea.sflag [#allocation5], %s210
          %s212 = sand.u32 %s42, 1
          %s213 = smul.addr %s212, 8
          %s214 = scalar_lea.vmem [#allocation4], %s213
          %s216 = ssub.s32 128, 128
          %217 = vsyncadd %s211, %s216
          %s218 = smul.addr %s25, 4
          %s219 = sadd.s32 %s26, %s218
          %s220 = smul.addr %s219, 128
          %s221 = scalar_lea.hbm %s0, %s220
          %s223 = sshll.u32 %s214, 4
          %s224 = int_to_ptr.vmem [resolvable:$true] %s223
          %226 = dma.hbm_to_vmem [thread:$0]  %s221, 128, %s224, %s211
        $region32: #{tpu_custom_call.1} parent=27 // pred_fallthru
          _
      $region28: #{tpu_custom_call.1} parent=5 // pred_fallthru
        _
      %p227 = scmp.le.s32.totalorder 1, %s18
      %p228 = scmp.lt.s32.totalorder %s18, 5
      %p229 = pnand %p227, %p228
      %p230 = pneg %p229
      // Predicated region
      $region33: #{tpu_custom_call.1} parent=5 // pred_check
        _
      $region34: #{tpu_custom_call.1} parent=5 // pred_check_branch
        %232 = sbr.rel (%p229) target = $region36
      $region35: #{tpu_custom_call.1} parent=5 // pred_region
        %s233 = ssub.s32 %s18, 1
        %s234 = sand.u32 %s45, 1
        %s235 = scalar_lea.sflag [#allocation5], %s234
        %s236 = sand.u32 %s45, 1
        %s237 = smul.addr %s236, 8
        %s238 = scalar_lea.vmem [#allocation4], %s237
        // Predicated region
        $region37: #{tpu_custom_call.1} parent=35 // pred_check
          %p239 = pneg %p58
        $region38: #{tpu_custom_call.1} parent=35 // pred_check_branch
          %241 = sbr.rel (%p239) target = $region40
        $region39: #{tpu_custom_call.1} parent=35 // pred_region
          %242 = dma.done %s235, 128
        $region40: #{tpu_custom_call.1} parent=35 // pred_fallthru
          _
        // Predicated region
        $region41: #{tpu_custom_call.1} parent=35 // pred_check
          %p243 = pneg %p79
        $region42: #{tpu_custom_call.1} parent=35 // pred_check_branch
          %245 = sbr.rel (%p243) target = $region44
        $region43: #{tpu_custom_call.1} parent=35 // pred_region
          %246 = dma.done [#allocation8], 2048
        $region44: #{tpu_custom_call.1} parent=35 // pred_fallthru
          _
        // Predicated region
        $region45: #{tpu_custom_call.1} parent=35 // pred_check
          %p247 = pneg %p100
        $region46: #{tpu_custom_call.1} parent=35 // pred_check_branch
          %249 = sbr.rel (%p247) target = $region48
        $region47: #{tpu_custom_call.1} parent=35 // pred_region
          %250 = dma.done [#allocation8], 2048
        $region48: #{tpu_custom_call.1} parent=35 // pred_fallthru
          _
        // Predicated region
        $region49: #{tpu_custom_call.1} parent=35 // pred_check
          %p251 = pneg %p121
        $region50: #{tpu_custom_call.1} parent=35 // pred_check_branch
          %253 = sbr.rel (%p251) target = $region52
        $region51: #{tpu_custom_call.1} parent=35 // pred_region
          %254 = dma.done [#allocation11], 2048
        $region52: #{tpu_custom_call.1} parent=35 // pred_fallthru
          _
        %s255 = sand.u32 %s45, 1
        %s256 = scalar_lea.sflag [#allocation5], %s255
        %s257 = sand.u32 %s45, 1
        %s258 = smul.addr %s257, 8
        %s259 = scalar_lea.vmem [#allocation4], %s258
        %p260 = pneg %p58
        %p261 = pneg %p55
        %p262 = pneg %p79
        %p263 = pneg %p76
        %p264 = pneg %p100
        %p265 = pneg %p97
        %p266 = pneg %p121
        %p267 = pneg %p118
        %p268 = pneg %p149
        %p269 = pneg %p146
        %s270 = sand.u32 %s136, 1
        %s271 = scalar_lea.sflag [#allocation6], %s270
        %s272 = sand.u32 %s136, 1
        %s273 = smul.addr %s272, 8
        %s274 = scalar_lea.vmem [#allocation12], %s273
        %p275 = scmp.eq.s32.totalorder %s28, 0
        // Predicated region
        $region53: #{tpu_custom_call.1} parent=35 // pred_check
          %p276 = pneg %p275
        $region54: #{tpu_custom_call.1} parent=35 // pred_check_branch
          %278 = sbr.rel (%p276) target = $region56
        $region55: #{tpu_custom_call.1} parent=35 // pred_region
          %279 = vst [vmem:[#allocation2] sm:$0xff] 0.0
          %280 = vst [vmem:[#allocation3] sm:$0xff] 0.0
        $region56: #{tpu_custom_call.1} parent=35 // pred_fallthru
          _
        %v281 = vld [vmem:[%s238] sm:$0xff]
        %v282 = vld [vmem:[#allocation7] sm:$0xff]
        %v283 = vld [vmem:[#allocation7 + $0x8] sm:$0xff]
        %v284 = vld [vmem:[#allocation7 + $0x10] sm:$0xff]
        %v285 = vld [vmem:[#allocation7 + $0x18] sm:$0xff]
        %v286 = vld [vmem:[#allocation7 + $0x20] sm:$0xff]
        %v287 = vld [vmem:[#allocation7 + $0x28] sm:$0xff]
        %v288 = vld [vmem:[#allocation7 + $0x30] sm:$0xff]
        %v289 = vld [vmem:[#allocation7 + $0x38] sm:$0xff]
        %v290 = vld [vmem:[#allocation7 + $0x40] sm:$0xff]
        %v291 = vld [vmem:[#allocation7 + $0x48] sm:$0xff]
        %v292 = vld [vmem:[#allocation7 + $0x50] sm:$0xff]
        %v293 = vld [vmem:[#allocation7 + $0x58] sm:$0xff]
        %v294 = vld [vmem:[#allocation7 + $0x60] sm:$0xff]
        %v295 = vld [vmem:[#allocation7 + $0x68] sm:$0xff]
        %v296 = vld [vmem:[#allocation7 + $0x70] sm:$0xff]
        %v297 = vld [vmem:[#allocation7 + $0x78] sm:$0xff]
        %v298 = vld [vmem:[#allocation2] sm:$0xff]
        %v299 = vld [vmem:[#allocation9] sm:$0xff]
        %v300 = vld [vmem:[#allocation9 + $0x8] sm:$0xff]
        %v301 = vld [vmem:[#allocation9 + $0x10] sm:$0xff]
        %v302 = vld [vmem:[#allocation9 + $0x18] sm:$0xff]
        %v303 = vld [vmem:[#allocation9 + $0x20] sm:$0xff]
        %v304 = vld [vmem:[#allocation9 + $0x28] sm:$0xff]
        %v305 = vld [vmem:[#allocation9 + $0x30] sm:$0xff]
        %v306 = vld [vmem:[#allocation9 + $0x38] sm:$0xff]
        %v307 = vld [vmem:[#allocation9 + $0x40] sm:$0xff]
        %v308 = vld [vmem:[#allocation9 + $0x48] sm:$0xff]
        %v309 = vld [vmem:[#allocation9 + $0x50] sm:$0xff]
        %v310 = vld [vmem:[#allocation9 + $0x58] sm:$0xff]
        %v311 = vld [vmem:[#allocation9 + $0x60] sm:$0xff]
        %v312 = vld [vmem:[#allocation9 + $0x68] sm:$0xff]
        %v313 = vld [vmem:[#allocation9 + $0x70] sm:$0xff]
        %v314 = vld [vmem:[#allocation9 + $0x78] sm:$0xff]
        %315 = vmatprep.subr.mxu0 0.0
        %v316 = vand.u32 %v299, 4294901760
        %317 = vmatpush1.msra.mxu0 %v316
        %318 = vmatprep.subr.mxu0 0.0
        %v319 = vand.u32 %v300, 4294901760
        %320 = vmatpush1.msra.mxu0 %v319
        %321 = vmatprep.subr.mxu0 0.0
        %v322 = vand.u32 %v301, 4294901760
        %323 = vmatpush1.msra.mxu0 %v322
        %324 = vmatprep.subr.mxu0 0.0
        %v325 = vand.u32 %v302, 4294901760
        %326 = vmatpush1.msra.mxu0 %v325
        %327 = vmatprep.subr.mxu0 0.0
        %v328 = vand.u32 %v303, 4294901760
        %329 = vmatpush1.msra.mxu0 %v328
        %330 = vmatprep.subr.mxu0 0.0
        %v331 = vand.u32 %v304, 4294901760
        %332 = vmatpush1.msra.mxu0 %v331
        %333 = vmatprep.subr.mxu0 0.0
        %v334 = vand.u32 %v305, 4294901760
        %335 = vmatpush1.msra.mxu0 %v334
        %336 = vmatprep.subr.mxu0 0.0
        %v337 = vand.u32 %v306, 4294901760
        %338 = vmatpush1.msra.mxu0 %v337
        %339 = vmatprep.subr.mxu0 0.0
        %v340 = vand.u32 %v307, 4294901760
        %341 = vmatpush1.msra.mxu0 %v340
        %342 = vmatprep.subr.mxu0 0.0
        %v343 = vand.u32 %v308, 4294901760
        %344 = vmatpush1.msra.mxu0 %v343
        %345 = vmatprep.subr.mxu0 0.0
        %v346 = vand.u32 %v309, 4294901760
        %347 = vmatpush1.msra.mxu0 %v346
        %348 = vmatprep.subr.mxu0 0.0
        %v349 = vand.u32 %v310, 4294901760
        %350 = vmatpush1.msra.mxu0 %v349
        %351 = vmatprep.subr.mxu0 0.0
        %v352 = vand.u32 %v311, 4294901760
        %353 = vmatpush1.msra.mxu0 %v352
        %354 = vmatprep.subr.mxu0 0.0
        %v355 = vand.u32 %v312, 4294901760
        %356 = vmatpush1.msra.mxu0 %v355
        %357 = vmatprep.subr.mxu0 0.0
        %v358 = vand.u32 %v313, 4294901760
        %359 = vmatpush1.msra.mxu0 %v358
        %360 = vmatprep.subr.mxu0 0.0
        %v361 = vand.u32 %v314, 4294901760
        %362 = vmatpush1.msra.mxu0 %v361
        %363 = vmatprep.subr.mxu0 0.0
        %364 = vmatpush1.msra.mxu0 0.0
        %365 = vmatprep.subr.mxu0 0.0
        %366 = vmatpush1.msra.mxu0 0.0
        %367 = vmatprep.subr.mxu0 0.0
        %368 = vmatpush1.msra.mxu0 0.0
        %369 = vmatprep.subr.mxu0 0.0
        %370 = vmatpush1.msra.mxu0 0.0
        %371 = vmatprep.subr.mxu0 0.0
        %372 = vmatpush1.msra.mxu0 0.0
        %373 = vmatprep.subr.mxu0 0.0
        %374 = vmatpush1.msra.mxu0 0.0
        %375 = vmatprep.subr.mxu0 0.0
        %376 = vmatpush1.msra.mxu0 0.0
        %377 = vmatprep.subr.mxu0 0.0
        %378 = vmatpush1.msra.mxu0 0.0
        %379 = vmatprep.subr.mxu0 0.0
        %380 = vmatpush1.msra.mxu0 0.0
        %381 = vmatprep.subr.mxu0 0.0
        %382 = vmatpush1.msra.mxu0 0.0
        %383 = vmatprep.subr.mxu0 0.0
        %384 = vmatpush1.msra.mxu0 0.0
        %385 = vmatprep.subr.mxu0 0.0
        %386 = vmatpush1.msra.mxu0 0.0
        %387 = vmatprep.subr.mxu0 0.0
        %388 = vmatpush1.msra.mxu0 0.0
        %389 = vmatprep.subr.mxu0 0.0
        %390 = vmatpush1.msra.mxu0 0.0
        %391 = vmatprep.subr.mxu0 0.0
        %392 = vmatpush1.msra.mxu0 0.0
        %393 = vmatprep.subr.mxu0 0.0
        %394 = vmatpush1.msra.mxu0 0.0
        %395 = vmatprep.mubr.f32.mxu0 0.0
        %v396 = vand.u32 %v298, 4294901760
        %v397 = vsub.f32 %v298, %v396
        %v398 = vand.u32 %v397, 4294901760
        %v399 = vsub.f32 %v397, %v398
        %v400 = vand.u32 %v399, 4294901760
        %401 = vmatmul.mubr.f32.gmra.mrb[0].mxu0 %v400
        %v402 = vpop.f32.mrb[0].mxu0
        %v403 = vadd.f32 0.0, %v402
        %v404 = vpop.f32.mrb[0].mxu0
        %405 = vdwg.mxu0
        %406 = vmatprep.subr.mxu0 0.0
        %v407 = vand.u32 %v299, 4294901760
        %v408 = vsub.f32 %v299, %v407
        %v409 = vand.u32 %v408, 4294901760
        %v410 = vsub.f32 %v408, %v409
        %v411 = vand.u32 %v410, 4294901760
        %412 = vmatpush1.msra.mxu0 %v411
        %413 = vmatprep.subr.mxu0 0.0
        %v414 = vand.u32 %v300, 4294901760
        %v415 = vsub.f32 %v300, %v414
        %v416 = vand.u32 %v415, 4294901760
        %v417 = vsub.f32 %v415, %v416
        %v418 = vand.u32 %v417, 4294901760
        %419 = vmatpush1.msra.mxu0 %v418
        %420 = vmatprep.subr.mxu0 0.0
        %v421 = vand.u32 %v301, 4294901760
        %v422 = vsub.f32 %v301, %v421
        %v423 = vand.u32 %v422, 4294901760
        %v424 = vsub.f32 %v422, %v423
        %v425 = vand.u32 %v424, 4294901760
        %426 = vmatpush1.msra.mxu0 %v425
        %427 = vmatprep.subr.mxu0 0.0
        %v428 = vand.u32 %v302, 4294901760
        %v429 = vsub.f32 %v302, %v428
        %v430 = vand.u32 %v429, 4294901760
        %v431 = vsub.f32 %v429, %v430
        %v432 = vand.u32 %v431, 4294901760
        %433 = vmatpush1.msra.mxu0 %v432
        %434 = vmatprep.subr.mxu0 0.0
        %v435 = vand.u32 %v303, 4294901760
        %v436 = vsub.f32 %v303, %v435
        %v437 = vand.u32 %v436, 4294901760
        %v438 = vsub.f32 %v436, %v437
        %v439 = vand.u32 %v438, 4294901760
        %440 = vmatpush1.msra.mxu0 %v439
        %441 = vmatprep.subr.mxu0 0.0
        %v442 = vand.u32 %v304, 4294901760
        %v443 = vsub.f32 %v304, %v442
        %v444 = vand.u32 %v443, 4294901760
        %v445 = vsub.f32 %v443, %v444
        %v446 = vand.u32 %v445, 4294901760
        %447 = vmatpush1.msra.mxu0 %v446
        %448 = vmatprep.subr.mxu0 0.0
        %v449 = vand.u32 %v305, 4294901760
        %v450 = vsub.f32 %v305, %v449
        %v451 = vand.u32 %v450, 4294901760
        %v452 = vsub.f32 %v450, %v451
        %v453 = vand.u32 %v452, 4294901760
        %454 = vmatpush1.msra.mxu0 %v453
        %455 = vmatprep.subr.mxu0 0.0
        %v456 = vand.u32 %v306, 4294901760
        %v457 = vsub.f32 %v306, %v456
        %v458 = vand.u32 %v457, 4294901760
        %v459 = vsub.f32 %v457, %v458
        %v460 = vand.u32 %v459, 4294901760
        %461 = vmatpush1.msra.mxu0 %v460
        %462 = vmatprep.subr.mxu0 0.0
        %v463 = vand.u32 %v307, 4294901760
        %v464 = vsub.f32 %v307, %v463
        %v465 = vand.u32 %v464, 4294901760
        %v466 = vsub.f32 %v464, %v465
        %v467 = vand.u32 %v466, 4294901760
        %468 = vmatpush1.msra.mxu0 %v467
        %469 = vmatprep.subr.mxu0 0.0
        %v470 = vand.u32 %v308, 4294901760
        %v471 = vsub.f32 %v308, %v470
        %v472 = vand.u32 %v471, 4294901760
        %v473 = vsub.f32 %v471, %v472
        %v474 = vand.u32 %v473, 4294901760
        %475 = vmatpush1.msra.mxu0 %v474
        %476 = vmatprep.subr.mxu0 0.0
        %v477 = vand.u32 %v309, 4294901760
        %v478 = vsub.f32 %v309, %v477
        %v479 = vand.u32 %v478, 4294901760
        %v480 = vsub.f32 %v478, %v479
        %v481 = vand.u32 %v480, 4294901760
        %482 = vmatpush1.msra.mxu0 %v481
        %483 = vmatprep.subr.mxu0 0.0
        %v484 = vand.u32 %v310, 4294901760
        %v485 = vsub.f32 %v310, %v484
        %v486 = vand.u32 %v485, 4294901760
        %v487 = vsub.f32 %v485, %v486
        %v488 = vand.u32 %v487, 4294901760
        %489 = vmatpush1.msra.mxu0 %v488
        %490 = vmatprep.subr.mxu0 0.0
        %v491 = vand.u32 %v311, 4294901760
        %v492 = vsub.f32 %v311, %v491
        %v493 = vand.u32 %v492, 4294901760
        %v494 = vsub.f32 %v492, %v493
        %v495 = vand.u32 %v494, 4294901760
        %496 = vmatpush1.msra.mxu0 %v495
        %497 = vmatprep.subr.mxu0 0.0
        %v498 = vand.u32 %v312, 4294901760
        %v499 = vsub.f32 %v312, %v498
        %v500 = vand.u32 %v499, 4294901760
        %v501 = vsub.f32 %v499, %v500
        %v502 = vand.u32 %v501, 4294901760
        %503 = vmatpush1.msra.mxu0 %v502
        %504 = vmatprep.subr.mxu0 0.0
        %v505 = vand.u32 %v313, 4294901760
        %v506 = vsub.f32 %v313, %v505
        %v507 = vand.u32 %v506, 4294901760
        %v508 = vsub.f32 %v506, %v507
        %v509 = vand.u32 %v508, 4294901760
        %510 = vmatpush1.msra.mxu0 %v509
        %511 = vmatprep.subr.mxu0 0.0
        %v512 = vand.u32 %v314, 4294901760
        %v513 = vsub.f32 %v314, %v512
        %v514 = vand.u32 %v513, 4294901760
        %v515 = vsub.f32 %v513, %v514
        %v516 = vand.u32 %v515, 4294901760
        %517 = vmatpush1.msra.mxu0 %v516
        %518 = vmatprep.subr.mxu0 0.0
        %519 = vmatpush1.msra.mxu0 0.0
        %520 = vmatprep.subr.mxu0 0.0
        %521 = vmatpush1.msra.mxu0 0.0
        %522 = vmatprep.subr.mxu0 0.0
        %523 = vmatpush1.msra.mxu0 0.0
        %524 = vmatprep.subr.mxu0 0.0
        %525 = vmatpush1.msra.mxu0 0.0
        %526 = vmatprep.subr.mxu0 0.0
        %527 = vmatpush1.msra.mxu0 0.0
        %528 = vmatprep.subr.mxu0 0.0
        %529 = vmatpush1.msra.mxu0 0.0
        %530 = vmatprep.subr.mxu0 0.0
        %531 = vmatpush1.msra.mxu0 0.0
        %532 = vmatprep.subr.mxu0 0.0
        %533 = vmatpush1.msra.mxu0 0.0
        %534 = vmatprep.subr.mxu0 0.0
        %535 = vmatpush1.msra.mxu0 0.0
        %536 = vmatprep.subr.mxu0 0.0
        %537 = vmatpush1.msra.mxu0 0.0
        %538 = vmatprep.subr.mxu0 0.0
        %539 = vmatpush1.msra.mxu0 0.0
        %540 = vmatprep.subr.mxu0 0.0
        %541 = vmatpush1.msra.mxu0 0.0
        %542 = vmatprep.subr.mxu0 0.0
        %543 = vmatpush1.msra.mxu0 0.0
        %544 = vmatprep.subr.mxu0 0.0
        %545 = vmatpush1.msra.mxu0 0.0
        %546 = vmatprep.subr.mxu0 0.0
        %547 = vmatpush1.msra.mxu0 0.0
        %548 = vmatprep.subr.mxu0 0.0
        %549 = vmatpush1.msra.mxu0 0.0
        %550 = vmatprep.mubr.f32.mxu0 0.0
        %v551 = vand.u32 %v298, 4294901760
        %552 = vmatmul.mubr.f32.gmra.mrb[0].mxu0 %v551
        %v553 = vpop.f32.mrb[0].mxu0
        %v554 = vadd.f32 %v403, %v553
        %v555 = vpop.f32.mrb[0].mxu0
        %556 = vdwg.mxu0
        %557 = vmatprep.subr.mxu0 0.0
        %v558 = vand.u32 %v299, 4294901760
        %v559 = vsub.f32 %v299, %v558
        %560 = vmatpush1.msra.mxu0 %v559
        %561 = vmatprep.subr.mxu0 0.0
        %v562 = vand.u32 %v300, 4294901760
        %v563 = vsub.f32 %v300, %v562
        %564 = vmatpush1.msra.mxu0 %v563
        %565 = vmatprep.subr.mxu0 0.0
        %v566 = vand.u32 %v301, 4294901760
        %v567 = vsub.f32 %v301, %v566
        %568 = vmatpush1.msra.mxu0 %v567
        %569 = vmatprep.subr.mxu0 0.0
        %v570 = vand.u32 %v302, 4294901760
        %v571 = vsub.f32 %v302, %v570
        %572 = vmatpush1.msra.mxu0 %v571
        %573 = vmatprep.subr.mxu0 0.0
        %v574 = vand.u32 %v303, 4294901760
        %v575 = vsub.f32 %v303, %v574
        %576 = vmatpush1.msra.mxu0 %v575
        %577 = vmatprep.subr.mxu0 0.0
        %v578 = vand.u32 %v304, 4294901760
        %v579 = vsub.f32 %v304, %v578
        %580 = vmatpush1.msra.mxu0 %v579
        %581 = vmatprep.subr.mxu0 0.0
        %v582 = vand.u32 %v305, 4294901760
        %v583 = vsub.f32 %v305, %v582
        %584 = vmatpush1.msra.mxu0 %v583
        %585 = vmatprep.subr.mxu0 0.0
        %v586 = vand.u32 %v306, 4294901760
        %v587 = vsub.f32 %v306, %v586
        %588 = vmatpush1.msra.mxu0 %v587
        %589 = vmatprep.subr.mxu0 0.0
        %v590 = vand.u32 %v307, 4294901760
        %v591 = vsub.f32 %v307, %v590
        %592 = vmatpush1.msra.mxu0 %v591
        %593 = vmatprep.subr.mxu0 0.0
        %v594 = vand.u32 %v308, 4294901760
        %v595 = vsub.f32 %v308, %v594
        %596 = vmatpush1.msra.mxu0 %v595
        %597 = vmatprep.subr.mxu0 0.0
        %v598 = vand.u32 %v309, 4294901760
        %v599 = vsub.f32 %v309, %v598
        %600 = vmatpush1.msra.mxu0 %v599
        %601 = vmatprep.subr.mxu0 0.0
        %v602 = vand.u32 %v310, 4294901760
        %v603 = vsub.f32 %v310, %v602
        %604 = vmatpush1.msra.mxu0 %v603
        %605 = vmatprep.subr.mxu0 0.0
        %v606 = vand.u32 %v311, 4294901760
        %v607 = vsub.f32 %v311, %v606
        %608 = vmatpush1.msra.mxu0 %v607
        %609 = vmatprep.subr.mxu0 0.0
        %v610 = vand.u32 %v312, 4294901760
        %v611 = vsub.f32 %v312, %v610
        %612 = vmatpush1.msra.mxu0 %v611
        %613 = vmatprep.subr.mxu0 0.0
        %v614 = vand.u32 %v313, 4294901760
        %v615 = vsub.f32 %v313, %v614
        %616 = vmatpush1.msra.mxu0 %v615
        %617 = vmatprep.subr.mxu0 0.0
        %v618 = vand.u32 %v314, 4294901760
        %v619 = vsub.f32 %v314, %v618
        %620 = vmatpush1.msra.mxu0 %v619
        %621 = vmatprep.subr.mxu0 0.0
        %622 = vmatpush1.msra.mxu0 0.0
        %623 = vmatprep.subr.mxu0 0.0
        %624 = vmatpush1.msra.mxu0 0.0
        %625 = vmatprep.subr.mxu0 0.0
        %626 = vmatpush1.msra.mxu0 0.0
        %627 = vmatprep.subr.mxu0 0.0
        %628 = vmatpush1.msra.mxu0 0.0
        %629 = vmatprep.subr.mxu0 0.0
        %630 = vmatpush1.msra.mxu0 0.0
        %631 = vmatprep.subr.mxu0 0.0
        %632 = vmatpush1.msra.mxu0 0.0
        %633 = vmatprep.subr.mxu0 0.0
        %634 = vmatpush1.msra.mxu0 0.0
        %635 = vmatprep.subr.mxu0 0.0
        %636 = vmatpush1.msra.mxu0 0.0
        %637 = vmatprep.subr.mxu0 0.0
        %638 = vmatpush1.msra.mxu0 0.0
        %639 = vmatprep.subr.mxu0 0.0
        %640 = vmatpush1.msra.mxu0 0.0
        %641 = vmatprep.subr.mxu0 0.0
        %642 = vmatpush1.msra.mxu0 0.0
        %643 = vmatprep.subr.mxu0 0.0
        %644 = vmatpush1.msra.mxu0 0.0
        %645 = vmatprep.subr.mxu0 0.0
        %646 = vmatpush1.msra.mxu0 0.0
        %647 = vmatprep.subr.mxu0 0.0
        %648 = vmatpush1.msra.mxu0 0.0
        %649 = vmatprep.subr.mxu0 0.0
        %650 = vmatpush1.msra.mxu0 0.0
        %651 = vmatprep.subr.mxu0 0.0
        %652 = vmatpush1.msra.mxu0 0.0
        %653 = vmatprep.mubr.f32.mxu0 0.0
        %v654 = vand.u32 %v298, 4294901760
        %v655 = vsub.f32 %v298, %v654
        %656 = vmatmul.mubr.f32.gmra.mrb[0].mxu0 %v655
        %v657 = vpop.f32.mrb[0].mxu0
        %v658 = vadd.f32 %v554, %v657
        %v659 = vpop.f32.mrb[0].mxu0
        %660 = vdwg.mxu0
        %661 = vmatprep.subr.mxu0 0.0
        %v662 = vand.u32 %v299, 4294901760
        %663 = vmatpush1.msra.mxu0 %v662
        %664 = vmatprep.subr.mxu0 0.0
        %v665 = vand.u32 %v300, 4294901760
        %666 = vmatpush1.msra.mxu0 %v665
        %667 = vmatprep.subr.mxu0 0.0
        %v668 = vand.u32 %v301, 4294901760
        %669 = vmatpush1.msra.mxu0 %v668
        %670 = vmatprep.subr.mxu0 0.0
        %v671 = vand.u32 %v302, 4294901760
        %672 = vmatpush1.msra.mxu0 %v671
        %673 = vmatprep.subr.mxu0 0.0
        %v674 = vand.u32 %v303, 4294901760
        %675 = vmatpush1.msra.mxu0 %v674
        %676 = vmatprep.subr.mxu0 0.0
        %v677 = vand.u32 %v304, 4294901760
        %678 = vmatpush1.msra.mxu0 %v677
        %679 = vmatprep.subr.mxu0 0.0
        %v680 = vand.u32 %v305, 4294901760
        %681 = vmatpush1.msra.mxu0 %v680
        %682 = vmatprep.subr.mxu0 0.0
        %v683 = vand.u32 %v306, 4294901760
        %684 = vmatpush1.msra.mxu0 %v683
        %685 = vmatprep.subr.mxu0 0.0
        %v686 = vand.u32 %v307, 4294901760
        %687 = vmatpush1.msra.mxu0 %v686
        %688 = vmatprep.subr.mxu0 0.0
        %v689 = vand.u32 %v308, 4294901760
        %690 = vmatpush1.msra.mxu0 %v689
        %691 = vmatprep.subr.mxu0 0.0
        %v692 = vand.u32 %v309, 4294901760
        %693 = vmatpush1.msra.mxu0 %v692
        %694 = vmatprep.subr.mxu0 0.0
        %v695 = vand.u32 %v310, 4294901760
        %696 = vmatpush1.msra.mxu0 %v695
        %697 = vmatprep.subr.mxu0 0.0
        %v698 = vand.u32 %v311, 4294901760
        %699 = vmatpush1.msra.mxu0 %v698
        %700 = vmatprep.subr.mxu0 0.0
        %v701 = vand.u32 %v312, 4294901760
        %702 = vmatpush1.msra.mxu0 %v701
        %703 = vmatprep.subr.mxu0 0.0
        %v704 = vand.u32 %v313, 4294901760
        %705 = vmatpush1.msra.mxu0 %v704
        %706 = vmatprep.subr.mxu0 0.0
        %v707 = vand.u32 %v314, 4294901760
        %708 = vmatpush1.msra.mxu0 %v707
        %709 = vmatprep.subr.mxu0 0.0
        %710 = vmatpush1.msra.mxu0 0.0
        %711 = vmatprep.subr.mxu0 0.0
        %712 = vmatpush1.msra.mxu0 0.0
        %713 = vmatprep.subr.mxu0 0.0
        %714 = vmatpush1.msra.mxu0 0.0
        %715 = vmatprep.subr.mxu0 0.0
        %716 = vmatpush1.msra.mxu0 0.0
        %717 = vmatprep.subr.mxu0 0.0
        %718 = vmatpush1.msra.mxu0 0.0
        %719 = vmatprep.subr.mxu0 0.0
        %720 = vmatpush1.msra.mxu0 0.0
        %721 = vmatprep.subr.mxu0 0.0
        %722 = vmatpush1.msra.mxu0 0.0
        %723 = vmatprep.subr.mxu0 0.0
        %724 = vmatpush1.msra.mxu0 0.0
        %725 = vmatprep.subr.mxu0 0.0
        %726 = vmatpush1.msra.mxu0 0.0
        %727 = vmatprep.subr.mxu0 0.0
        %728 = vmatpush1.msra.mxu0 0.0
        %729 = vmatprep.subr.mxu0 0.0
        %730 = vmatpush1.msra.mxu0 0.0
        %731 = vmatprep.subr.mxu0 0.0
        %732 = vmatpush1.msra.mxu0 0.0
        %733 = vmatprep.subr.mxu0 0.0
        %734 = vmatpush1.msra.mxu0 0.0
        %735 = vmatprep.subr.mxu0 0.0
        %736 = vmatpush1.msra.mxu0 0.0
        %737 = vmatprep.subr.mxu0 0.0
        %738 = vmatpush1.msra.mxu0 0.0
        %739 = vmatprep.subr.mxu0 0.0
        %740 = vmatpush1.msra.mxu0 0.0
        %741 = vmatprep.mubr.f32.mxu0 0.0
        %v742 = vand.u32 %v298, 4294901760
        %v743 = vsub.f32 %v298, %v742
        %v744 = vand.u32 %v743, 4294901760
        %745 = vmatmul.mubr.f32.gmra.mrb[0].mxu0 %v744
        %v746 = vpop.f32.mrb[0].mxu0
        %v747 = vadd.f32 %v658, %v746
        %v748 = vpop.f32.mrb[0].mxu0
        %749 = vdwg.mxu0
        %750 = vmatprep.subr.mxu0 0.0
        %v751 = vand.u32 %v299, 4294901760
        %v752 = vsub.f32 %v299, %v751
        %v753 = vand.u32 %v752, 4294901760
        %754 = vmatpush1.msra.mxu0 %v753
        %755 = vmatprep.subr.mxu0 0.0
        %v756 = vand.u32 %v300, 4294901760
        %v757 = vsub.f32 %v300, %v756
        %v758 = vand.u32 %v757, 4294901760
        %759 = vmatpush1.msra.mxu0 %v758
        %760 = vmatprep.subr.mxu0 0.0
        %v761 = vand.u32 %v301, 4294901760
        %v762 = vsub.f32 %v301, %v761
        %v763 = vand.u32 %v762, 4294901760
        %764 = vmatpush1.msra.mxu0 %v763
        %765 = vmatprep.subr.mxu0 0.0
        %v766 = vand.u32 %v302, 4294901760
        %v767 = vsub.f32 %v302, %v766
        %v768 = vand.u32 %v767, 4294901760
        %769 = vmatpush1.msra.mxu0 %v768
        %770 = vmatprep.subr.mxu0 0.0
        %v771 = vand.u32 %v303, 4294901760
        %v772 = vsub.f32 %v303, %v771
        %v773 = vand.u32 %v772, 4294901760
        %774 = vmatpush1.msra.mxu0 %v773
        %775 = vmatprep.subr.mxu0 0.0
        %v776 = vand.u32 %v304, 4294901760
        %v777 = vsub.f32 %v304, %v776
        %v778 = vand.u32 %v777, 4294901760
        %779 = vmatpush1.msra.mxu0 %v778
        %780 = vmatprep.subr.mxu0 0.0
        %v781 = vand.u32 %v305, 4294901760
        %v782 = vsub.f32 %v305, %v781
        %v783 = vand.u32 %v782, 4294901760
        %784 = vmatpush1.msra.mxu0 %v783
        %785 = vmatprep.subr.mxu0 0.0
        %v786 = vand.u32 %v306, 4294901760
        %v787 = vsub.f32 %v306, %v786
        %v788 = vand.u32 %v787, 4294901760
        %789 = vmatpush1.msra.mxu0 %v788
        %790 = vmatprep.subr.mxu0 0.0
        %v791 = vand.u32 %v307, 4294901760
        %v792 = vsub.f32 %v307, %v791
        %v793 = vand.u32 %v792, 4294901760
        %794 = vmatpush1.msra.mxu0 %v793
        %795 = vmatprep.subr.mxu0 0.0
        %v796 = vand.u32 %v308, 4294901760
        %v797 = vsub.f32 %v308, %v796
        %v798 = vand.u32 %v797, 4294901760
        %799 = vmatpush1.msra.mxu0 %v798
        %800 = vmatprep.subr.mxu0 0.0
        %v801 = vand.u32 %v309, 4294901760
        %v802 = vsub.f32 %v309, %v801
        %v803 = vand.u32 %v802, 4294901760
        %804 = vmatpush1.msra.mxu0 %v803
        %805 = vmatprep.subr.mxu0 0.0
        %v806 = vand.u32 %v310, 4294901760
        %v807 = vsub.f32 %v310, %v806
        %v808 = vand.u32 %v807, 4294901760
        %809 = vmatpush1.msra.mxu0 %v808
        %810 = vmatprep.subr.mxu0 0.0
        %v811 = vand.u32 %v311, 4294901760
        %v812 = vsub.f32 %v311, %v811
        %v813 = vand.u32 %v812, 4294901760
        %814 = vmatpush1.msra.mxu0 %v813
        %815 = vmatprep.subr.mxu0 0.0
        %v816 = vand.u32 %v312, 4294901760
        %v817 = vsub.f32 %v312, %v816
        %v818 = vand.u32 %v817, 4294901760
        %819 = vmatpush1.msra.mxu0 %v818
        %820 = vmatprep.subr.mxu0 0.0
        %v821 = vand.u32 %v313, 4294901760
        %v822 = vsub.f32 %v313, %v821
        %v823 = vand.u32 %v822, 4294901760
        %824 = vmatpush1.msra.mxu0 %v823
        %825 = vmatprep.subr.mxu0 0.0
        %v826 = vand.u32 %v314, 4294901760
        %v827 = vsub.f32 %v314, %v826
        %v828 = vand.u32 %v827, 4294901760
        %829 = vmatpush1.msra.mxu0 %v828
        %830 = vmatprep.subr.mxu0 0.0
        %831 = vmatpush1.msra.mxu0 0.0
        %832 = vmatprep.subr.mxu0 0.0
        %833 = vmatpush1.msra.mxu0 0.0
        %834 = vmatprep.subr.mxu0 0.0
        %835 = vmatpush1.msra.mxu0 0.0
        %836 = vmatprep.subr.mxu0 0.0
        %837 = vmatpush1.msra.mxu0 0.0
        %838 = vmatprep.subr.mxu0 0.0
        %839 = vmatpush1.msra.mxu0 0.0
        %840 = vmatprep.subr.mxu0 0.0
        %841 = vmatpush1.msra.mxu0 0.0
        %842 = vmatprep.subr.mxu0 0.0
        %843 = vmatpush1.msra.mxu0 0.0
        %844 = vmatprep.subr.mxu0 0.0
        %845 = vmatpush1.msra.mxu0 0.0
        %846 = vmatprep.subr.mxu0 0.0
        %847 = vmatpush1.msra.mxu0 0.0
        %848 = vmatprep.subr.mxu0 0.0
        %849 = vmatpush1.msra.mxu0 0.0
        %850 = vmatprep.subr.mxu0 0.0
        %851 = vmatpush1.msra.mxu0 0.0
        %852 = vmatprep.subr.mxu0 0.0
        %853 = vmatpush1.msra.mxu0 0.0
        %854 = vmatprep.subr.mxu0 0.0
        %855 = vmatpush1.msra.mxu0 0.0
        %856 = vmatprep.subr.mxu0 0.0
        %857 = vmatpush1.msra.mxu0 0.0
        %858 = vmatprep.subr.mxu0 0.0
        %859 = vmatpush1.msra.mxu0 0.0
        %860 = vmatprep.subr.mxu0 0.0
        %861 = vmatpush1.msra.mxu0 0.0
        %862 = vmatprep.mubr.f32.mxu0 0.0
        %v863 = vand.u32 %v298, 4294901760
        %864 = vmatmul.mubr.f32.gmra.mrb[0].mxu0 %v863
        %v865 = vpop.f32.mrb[0].mxu0
        %v866 = vadd.f32 %v747, %v865
        %v867 = vpop.f32.mrb[0].mxu0
        %868 = vdwg.mxu0
        %869 = vmatprep.subr.mxu0 0.0
        %v870 = vand.u32 %v299, 4294901760
        %871 = vmatpush1.msra.mxu0 %v870
        %872 = vmatprep.subr.mxu0 0.0
        %v873 = vand.u32 %v300, 4294901760
        %874 = vmatpush1.msra.mxu0 %v873
        %875 = vmatprep.subr.mxu0 0.0
        %v876 = vand.u32 %v301, 4294901760
        %877 = vmatpush1.msra.mxu0 %v876
        %878 = vmatprep.subr.mxu0 0.0
        %v879 = vand.u32 %v302, 4294901760
        %880 = vmatpush1.msra.mxu0 %v879
        %881 = vmatprep.subr.mxu0 0.0
        %v882 = vand.u32 %v303, 4294901760
        %883 = vmatpush1.msra.mxu0 %v882
        %884 = vmatprep.subr.mxu0 0.0
        %v885 = vand.u32 %v304, 4294901760
        %886 = vmatpush1.msra.mxu0 %v885
        %887 = vmatprep.subr.mxu0 0.0
        %v888 = vand.u32 %v305, 4294901760
        %889 = vmatpush1.msra.mxu0 %v888
        %890 = vmatprep.subr.mxu0 0.0
        %v891 = vand.u32 %v306, 4294901760
        %892 = vmatpush1.msra.mxu0 %v891
        %893 = vmatprep.subr.mxu0 0.0
        %v894 = vand.u32 %v307, 4294901760
        %895 = vmatpush1.msra.mxu0 %v894
        %896 = vmatprep.subr.mxu0 0.0
        %v897 = vand.u32 %v308, 4294901760
        %898 = vmatpush1.msra.mxu0 %v897
        %899 = vmatprep.subr.mxu0 0.0
        %v900 = vand.u32 %v309, 4294901760
        %901 = vmatpush1.msra.mxu0 %v900
        %902 = vmatprep.subr.mxu0 0.0
        %v903 = vand.u32 %v310, 4294901760
        %904 = vmatpush1.msra.mxu0 %v903
        %905 = vmatprep.subr.mxu0 0.0
        %v906 = vand.u32 %v311, 4294901760
        %907 = vmatpush1.msra.mxu0 %v906
        %908 = vmatprep.subr.mxu0 0.0
        %v909 = vand.u32 %v312, 4294901760
        %910 = vmatpush1.msra.mxu0 %v909
        %911 = vmatprep.subr.mxu0 0.0
        %v912 = vand.u32 %v313, 4294901760
        %913 = vmatpush1.msra.mxu0 %v912
        %914 = vmatprep.subr.mxu0 0.0
        %v915 = vand.u32 %v314, 4294901760
        %916 = vmatpush1.msra.mxu0 %v915
        %917 = vmatprep.subr.mxu0 0.0
        %918 = vmatpush1.msra.mxu0 0.0
        %919 = vmatprep.subr.mxu0 0.0
        %920 = vmatpush1.msra.mxu0 0.0
        %921 = vmatprep.subr.mxu0 0.0
        %922 = vmatpush1.msra.mxu0 0.0
        %923 = vmatprep.subr.mxu0 0.0
        %924 = vmatpush1.msra.mxu0 0.0
        %925 = vmatprep.subr.mxu0 0.0
        %926 = vmatpush1.msra.mxu0 0.0
        %927 = vmatprep.subr.mxu0 0.0
        %928 = vmatpush1.msra.mxu0 0.0
        %929 = vmatprep.subr.mxu0 0.0
        %930 = vmatpush1.msra.mxu0 0.0
        %931 = vmatprep.subr.mxu0 0.0
        %932 = vmatpush1.msra.mxu0 0.0
        %933 = vmatprep.subr.mxu0 0.0
        %934 = vmatpush1.msra.mxu0 0.0
        %935 = vmatprep.subr.mxu0 0.0
        %936 = vmatpush1.msra.mxu0 0.0
        %937 = vmatprep.subr.mxu0 0.0
        %938 = vmatpush1.msra.mxu0 0.0
        %939 = vmatprep.subr.mxu0 0.0
        %940 = vmatpush1.msra.mxu0 0.0
        %941 = vmatprep.subr.mxu0 0.0
        %942 = vmatpush1.msra.mxu0 0.0
        %943 = vmatprep.subr.mxu0 0.0
        %944 = vmatpush1.msra.mxu0 0.0
        %945 = vmatprep.subr.mxu0 0.0
        %946 = vmatpush1.msra.mxu0 0.0
        %947 = vmatprep.subr.mxu0 0.0
        %948 = vmatpush1.msra.mxu0 0.0
        %949 = vmatprep.mubr.f32.mxu0 0.0
        %v950 = vand.u32 %v298, 4294901760
        %951 = vmatmul.mubr.f32.gmra.mrb[0].mxu0 %v950
        %v952 = vpop.f32.mrb[0].mxu0
        %v953 = vadd.f32 %v866, %v952
        %v954 = vpop.f32.mrb[0].mxu0
        %955 = vdwg.mxu0
        %956 = vmatprep.subr.mxu0 0.0
        %v957 = vand.u32 %v282, 4294901760
        %958 = vmatpush1.msra.mxu0 %v957
        %959 = vmatprep.subr.mxu0 0.0
        %v960 = vand.u32 %v283, 4294901760
        %961 = vmatpush1.msra.mxu0 %v960
        %962 = vmatprep.subr.mxu0 0.0
        %v963 = vand.u32 %v284, 4294901760
        %964 = vmatpush1.msra.mxu0 %v963
        %965 = vmatprep.subr.mxu0 0.0
        %v966 = vand.u32 %v285, 4294901760
        %967 = vmatpush1.msra.mxu0 %v966
        %968 = vmatprep.subr.mxu0 0.0
        %v969 = vand.u32 %v286, 4294901760
        %970 = vmatpush1.msra.mxu0 %v969
        %971 = vmatprep.subr.mxu0 0.0
        %v972 = vand.u32 %v287, 4294901760
        %973 = vmatpush1.msra.mxu0 %v972
        %974 = vmatprep.subr.mxu0 0.0
        %v975 = vand.u32 %v288, 4294901760
        %976 = vmatpush1.msra.mxu0 %v975
        %977 = vmatprep.subr.mxu0 0.0
        %v978 = vand.u32 %v289, 4294901760
        %979 = vmatpush1.msra.mxu0 %v978
        %980 = vmatprep.subr.mxu0 0.0
        %v981 = vand.u32 %v290, 4294901760
        %982 = vmatpush1.msra.mxu0 %v981
        %983 = vmatprep.subr.mxu0 0.0
        %v984 = vand.u32 %v291, 4294901760
        %985 = vmatpush1.msra.mxu0 %v984
        %986 = vmatprep.subr.mxu0 0.0
        %v987 = vand.u32 %v292, 4294901760
        %988 = vmatpush1.msra.mxu0 %v987
        %989 = vmatprep.subr.mxu0 0.0
        %v990 = vand.u32 %v293, 4294901760
        %991 = vmatpush1.msra.mxu0 %v990
        %992 = vmatprep.subr.mxu0 0.0
        %v993 = vand.u32 %v294, 4294901760
        %994 = vmatpush1.msra.mxu0 %v993
        %995 = vmatprep.subr.mxu0 0.0
        %v996 = vand.u32 %v295, 4294901760
        %997 = vmatpush1.msra.mxu0 %v996
        %998 = vmatprep.subr.mxu0 0.0
        %v999 = vand.u32 %v296, 4294901760
        %1000 = vmatpush1.msra.mxu0 %v999
        %1001 = vmatprep.subr.mxu0 0.0
        %v1002 = vand.u32 %v297, 4294901760
        %1003 = vmatpush1.msra.mxu0 %v1002
        %1004 = vmatprep.subr.mxu0 0.0
        %1005 = vmatpush1.msra.mxu0 0.0
        %1006 = vmatprep.subr.mxu0 0.0
        %1007 = vmatpush1.msra.mxu0 0.0
        %1008 = vmatprep.subr.mxu0 0.0
        %1009 = vmatpush1.msra.mxu0 0.0
        %1010 = vmatprep.subr.mxu0 0.0
        %1011 = vmatpush1.msra.mxu0 0.0
        %1012 = vmatprep.subr.mxu0 0.0
        %1013 = vmatpush1.msra.mxu0 0.0
        %1014 = vmatprep.subr.mxu0 0.0
        %1015 = vmatpush1.msra.mxu0 0.0
        %1016 = vmatprep.subr.mxu0 0.0
        %1017 = vmatpush1.msra.mxu0 0.0
        %1018 = vmatprep.subr.mxu0 0.0
        %1019 = vmatpush1.msra.mxu0 0.0
        %1020 = vmatprep.subr.mxu0 0.0
        %1021 = vmatpush1.msra.mxu0 0.0
        %1022 = vmatprep.subr.mxu0 0.0
        %1023 = vmatpush1.msra.mxu0 0.0
        %1024 = vmatprep.subr.mxu0 0.0
        %1025 = vmatpush1.msra.mxu0 0.0
        %1026 = vmatprep.subr.mxu0 0.0
        %1027 = vmatpush1.msra.mxu0 0.0
        %1028 = vmatprep.subr.mxu0 0.0
        %1029 = vmatpush1.msra.mxu0 0.0
        %1030 = vmatprep.subr.mxu0 0.0
        %1031 = vmatpush1.msra.mxu0 0.0
        %1032 = vmatprep.subr.mxu0 0.0
        %1033 = vmatpush1.msra.mxu0 0.0
        %1034 = vmatprep.subr.mxu0 0.0
        %1035 = vmatpush1.msra.mxu0 0.0
        %1036 = vmatprep.mubr.f32.mxu0 0.0
        %v1037 = vand.u32 %v281, 4294901760
        %v1038 = vsub.f32 %v281, %v1037
        %v1039 = vand.u32 %v1038, 4294901760
        %v1040 = vsub.f32 %v1038, %v1039
        %v1041 = vand.u32 %v1040, 4294901760
        %1042 = vmatmul.mubr.f32.gmra.mrb[0].mxu0 %v1041
        %v1043 = vpop.f32.mrb[0].mxu0
        %v1044 = vadd.f32 %v953, %v1043
        %v1045 = vpop.f32.mrb[0].mxu0
        %1046 = vdwg.mxu0
        %1047 = vmatprep.subr.mxu0 0.0
        %v1048 = vand.u32 %v282, 4294901760
        %v1049 = vsub.f32 %v282, %v1048
        %v1050 = vand.u32 %v1049, 4294901760
        %v1051 = vsub.f32 %v1049, %v1050
        %v1052 = vand.u32 %v1051, 4294901760
        %1053 = vmatpush1.msra.mxu0 %v1052
        %1054 = vmatprep.subr.mxu0 0.0
        %v1055 = vand.u32 %v283, 4294901760
        %v1056 = vsub.f32 %v283, %v1055
        %v1057 = vand.u32 %v1056, 4294901760
        %v1058 = vsub.f32 %v1056, %v1057
        %v1059 = vand.u32 %v1058, 4294901760
        %1060 = vmatpush1.msra.mxu0 %v1059
        %1061 = vmatprep.subr.mxu0 0.0
        %v1062 = vand.u32 %v284, 4294901760
        %v1063 = vsub.f32 %v284, %v1062
        %v1064 = vand.u32 %v1063, 4294901760
        %v1065 = vsub.f32 %v1063, %v1064
        %v1066 = vand.u32 %v1065, 4294901760
        %1067 = vmatpush1.msra.mxu0 %v1066
        %1068 = vmatprep.subr.mxu0 0.0
        %v1069 = vand.u32 %v285, 4294901760
        %v1070 = vsub.f32 %v285, %v1069
        %v1071 = vand.u32 %v1070, 4294901760
        %v1072 = vsub.f32 %v1070, %v1071
        %v1073 = vand.u32 %v1072, 4294901760
        %1074 = vmatpush1.msra.mxu0 %v1073
        %1075 = vmatprep.subr.mxu0 0.0
        %v1076 = vand.u32 %v286, 4294901760
        %v1077 = vsub.f32 %v286, %v1076
        %v1078 = vand.u32 %v1077, 4294901760
        %v1079 = vsub.f32 %v1077, %v1078
        %v1080 = vand.u32 %v1079, 4294901760
        %1081 = vmatpush1.msra.mxu0 %v1080
        %1082 = vmatprep.subr.mxu0 0.0
        %v1083 = vand.u32 %v287, 4294901760
        %v1084 = vsub.f32 %v287, %v1083
        %v1085 = vand.u32 %v1084, 4294901760
        %v1086 = vsub.f32 %v1084, %v1085
        %v1087 = vand.u32 %v1086, 4294901760
        %1088 = vmatpush1.msra.mxu0 %v1087
        %1089 = vmatprep.subr.mxu0 0.0
        %v1090 = vand.u32 %v288, 4294901760
        %v1091 = vsub.f32 %v288, %v1090
        %v1092 = vand.u32 %v1091, 4294901760
        %v1093 = vsub.f32 %v1091, %v1092
        %v1094 = vand.u32 %v1093, 4294901760
        %1095 = vmatpush1.msra.mxu0 %v1094
        %1096 = vmatprep.subr.mxu0 0.0
        %v1097 = vand.u32 %v289, 4294901760
        %v1098 = vsub.f32 %v289, %v1097
        %v1099 = vand.u32 %v1098, 4294901760
        %v1100 = vsub.f32 %v1098, %v1099
        %v1101 = vand.u32 %v1100, 4294901760
        %1102 = vmatpush1.msra.mxu0 %v1101
        %1103 = vmatprep.subr.mxu0 0.0
        %v1104 = vand.u32 %v290, 4294901760
        %v1105 = vsub.f32 %v290, %v1104
        %v1106 = vand.u32 %v1105, 4294901760
        %v1107 = vsub.f32 %v1105, %v1106
        %v1108 = vand.u32 %v1107, 4294901760
        %1109 = vmatpush1.msra.mxu0 %v1108
        %1110 = vmatprep.subr.mxu0 0.0
        %v1111 = vand.u32 %v291, 4294901760
        %v1112 = vsub.f32 %v291, %v1111
        %v1113 = vand.u32 %v1112, 4294901760
        %v1114 = vsub.f32 %v1112, %v1113
        %v1115 = vand.u32 %v1114, 4294901760
        %1116 = vmatpush1.msra.mxu0 %v1115
        %1117 = vmatprep.subr.mxu0 0.0
        %v1118 = vand.u32 %v292, 4294901760
        %v1119 = vsub.f32 %v292, %v1118
        %v1120 = vand.u32 %v1119, 4294901760
        %v1121 = vsub.f32 %v1119, %v1120
        %v1122 = vand.u32 %v1121, 4294901760
        %1123 = vmatpush1.msra.mxu0 %v1122
        %1124 = vmatprep.subr.mxu0 0.0
        %v1125 = vand.u32 %v293, 4294901760
        %v1126 = vsub.f32 %v293, %v1125
        %v1127 = vand.u32 %v1126, 4294901760
        %v1128 = vsub.f32 %v1126, %v1127
        %v1129 = vand.u32 %v1128, 4294901760
        %1130 = vmatpush1.msra.mxu0 %v1129
        %1131 = vmatprep.subr.mxu0 0.0
        %v1132 = vand.u32 %v294, 4294901760
        %v1133 = vsub.f32 %v294, %v1132
        %v1134 = vand.u32 %v1133, 4294901760
        %v1135 = vsub.f32 %v1133, %v1134
        %v1136 = vand.u32 %v1135, 4294901760
        %1137 = vmatpush1.msra.mxu0 %v1136
        %1138 = vmatprep.subr.mxu0 0.0
        %v1139 = vand.u32 %v295, 4294901760
        %v1140 = vsub.f32 %v295, %v1139
        %v1141 = vand.u32 %v1140, 4294901760
        %v1142 = vsub.f32 %v1140, %v1141
        %v1143 = vand.u32 %v1142, 4294901760
        %1144 = vmatpush1.msra.mxu0 %v1143
        %1145 = vmatprep.subr.mxu0 0.0
        %v1146 = vand.u32 %v296, 4294901760
        %v1147 = vsub.f32 %v296, %v1146
        %v1148 = vand.u32 %v1147, 4294901760
        %v1149 = vsub.f32 %v1147, %v1148
        %v1150 = vand.u32 %v1149, 4294901760
        %1151 = vmatpush1.msra.mxu0 %v1150
        %1152 = vmatprep.subr.mxu0 0.0
        %v1153 = vand.u32 %v297, 4294901760
        %v1154 = vsub.f32 %v297, %v1153
        %v1155 = vand.u32 %v1154, 4294901760
        %v1156 = vsub.f32 %v1154, %v1155
        %v1157 = vand.u32 %v1156, 4294901760
        %1158 = vmatpush1.msra.mxu0 %v1157
        %1159 = vmatprep.subr.mxu0 0.0
        %1160 = vmatpush1.msra.mxu0 0.0
        %1161 = vmatprep.subr.mxu0 0.0
        %1162 = vmatpush1.msra.mxu0 0.0
        %1163 = vmatprep.subr.mxu0 0.0
        %1164 = vmatpush1.msra.mxu0 0.0
        %1165 = vmatprep.subr.mxu0 0.0
        %1166 = vmatpush1.msra.mxu0 0.0
        %1167 = vmatprep.subr.mxu0 0.0
        %1168 = vmatpush1.msra.mxu0 0.0
        %1169 = vmatprep.subr.mxu0 0.0
        %1170 = vmatpush1.msra.mxu0 0.0
        %1171 = vmatprep.subr.mxu0 0.0
        %1172 = vmatpush1.msra.mxu0 0.0
        %1173 = vmatprep.subr.mxu0 0.0
        %1174 = vmatpush1.msra.mxu0 0.0
        %1175 = vmatprep.subr.mxu0 0.0
        %1176 = vmatpush1.msra.mxu0 0.0
        %1177 = vmatprep.subr.mxu0 0.0
        %1178 = vmatpush1.msra.mxu0 0.0
        %1179 = vmatprep.subr.mxu0 0.0
        %1180 = vmatpush1.msra.mxu0 0.0
        %1181 = vmatprep.subr.mxu0 0.0
        %1182 = vmatpush1.msra.mxu0 0.0
        %1183 = vmatprep.subr.mxu0 0.0
        %1184 = vmatpush1.msra.mxu0 0.0
        %1185 = vmatprep.subr.mxu0 0.0
        %1186 = vmatpush1.msra.mxu0 0.0
        %1187 = vmatprep.subr.mxu0 0.0
        %1188 = vmatpush1.msra.mxu0 0.0
        %1189 = vmatprep.subr.mxu0 0.0
        %1190 = vmatpush1.msra.mxu0 0.0
        %1191 = vmatprep.mubr.f32.mxu0 0.0
        %v1192 = vand.u32 %v281, 4294901760
        %1193 = vmatmul.mubr.f32.gmra.mrb[0].mxu0 %v1192
        %v1194 = vpop.f32.mrb[0].mxu0
        %v1195 = vadd.f32 %v1044, %v1194
        %v1196 = vpop.f32.mrb[0].mxu0
        %1197 = vdwg.mxu0
        %1198 = vmatprep.subr.mxu0 0.0
        %v1199 = vand.u32 %v282, 4294901760
        %v1200 = vsub.f32 %v282, %v1199
        %1201 = vmatpush1.msra.mxu0 %v1200
        %1202 = vmatprep.subr.mxu0 0.0
        %v1203 = vand.u32 %v283, 4294901760
        %v1204 = vsub.f32 %v283, %v1203
        %1205 = vmatpush1.msra.mxu0 %v1204
        %1206 = vmatprep.subr.mxu0 0.0
        %v1207 = vand.u32 %v284, 4294901760
        %v1208 = vsub.f32 %v284, %v1207
        %1209 = vmatpush1.msra.mxu0 %v1208
        %1210 = vmatprep.subr.mxu0 0.0
        %v1211 = vand.u32 %v285, 4294901760
        %v1212 = vsub.f32 %v285, %v1211
        %1213 = vmatpush1.msra.mxu0 %v1212
        %1214 = vmatprep.subr.mxu0 0.0
        %v1215 = vand.u32 %v286, 4294901760
        %v1216 = vsub.f32 %v286, %v1215
        %1217 = vmatpush1.msra.mxu0 %v1216
        %1218 = vmatprep.subr.mxu0 0.0
        %v1219 = vand.u32 %v287, 4294901760
        %v1220 = vsub.f32 %v287, %v1219
        %1221 = vmatpush1.msra.mxu0 %v1220
        %1222 = vmatprep.subr.mxu0 0.0
        %v1223 = vand.u32 %v288, 4294901760
        %v1224 = vsub.f32 %v288, %v1223
        %1225 = vmatpush1.msra.mxu0 %v1224
        %1226 = vmatprep.subr.mxu0 0.0
        %v1227 = vand.u32 %v289, 4294901760
        %v1228 = vsub.f32 %v289, %v1227
        %1229 = vmatpush1.msra.mxu0 %v1228
        %1230 = vmatprep.subr.mxu0 0.0
        %v1231 = vand.u32 %v290, 4294901760
        %v1232 = vsub.f32 %v290, %v1231
        %1233 = vmatpush1.msra.mxu0 %v1232
        %1234 = vmatprep.subr.mxu0 0.0
        %v1235 = vand.u32 %v291, 4294901760
        %v1236 = vsub.f32 %v291, %v1235
        %1237 = vmatpush1.msra.mxu0 %v1236
        %1238 = vmatprep.subr.mxu0 0.0
        %v1239 = vand.u32 %v292, 4294901760
        %v1240 = vsub.f32 %v292, %v1239
        %1241 = vmatpush1.msra.mxu0 %v1240
        %1242 = vmatprep.subr.mxu0 0.0
        %v1243 = vand.u32 %v293, 4294901760
        %v1244 = vsub.f32 %v293, %v1243
        %1245 = vmatpush1.msra.mxu0 %v1244
        %1246 = vmatprep.subr.mxu0 0.0
        %v1247 = vand.u32 %v294, 4294901760
        %v1248 = vsub.f32 %v294, %v1247
        %1249 = vmatpush1.msra.mxu0 %v1248
        %1250 = vmatprep.subr.mxu0 0.0
        %v1251 = vand.u32 %v295, 4294901760
        %v1252 = vsub.f32 %v295, %v1251
        %1253 = vmatpush1.msra.mxu0 %v1252
        %1254 = vmatprep.subr.mxu0 0.0
        %v1255 = vand.u32 %v296, 4294901760
        %v1256 = vsub.f32 %v296, %v1255
        %1257 = vmatpush1.msra.mxu0 %v1256
        %1258 = vmatprep.subr.mxu0 0.0
        %v1259 = vand.u32 %v297, 4294901760
        %v1260 = vsub.f32 %v297, %v1259
        %1261 = vmatpush1.msra.mxu0 %v1260
        %1262 = vmatprep.subr.mxu0 0.0
        %1263 = vmatpush1.msra.mxu0 0.0
        %1264 = vmatprep.subr.mxu0 0.0
        %1265 = vmatpush1.msra.mxu0 0.0
        %1266 = vmatprep.subr.mxu0 0.0
        %1267 = vmatpush1.msra.mxu0 0.0
        %1268 = vmatprep.subr.mxu0 0.0
        %1269 = vmatpush1.msra.mxu0 0.0
        %1270 = vmatprep.subr.mxu0 0.0
        %1271 = vmatpush1.msra.mxu0 0.0
        %1272 = vmatprep.subr.mxu0 0.0
        %1273 = vmatpush1.msra.mxu0 0.0
        %1274 = vmatprep.subr.mxu0 0.0
        %1275 = vmatpush1.msra.mxu0 0.0
        %1276 = vmatprep.subr.mxu0 0.0
        %1277 = vmatpush1.msra.mxu0 0.0
        %1278 = vmatprep.subr.mxu0 0.0
        %1279 = vmatpush1.msra.mxu0 0.0
        %1280 = vmatprep.subr.mxu0 0.0
        %1281 = vmatpush1.msra.mxu0 0.0
        %1282 = vmatprep.subr.mxu0 0.0
        %1283 = vmatpush1.msra.mxu0 0.0
        %1284 = vmatprep.subr.mxu0 0.0
        %1285 = vmatpush1.msra.mxu0 0.0
        %1286 = vmatprep.subr.mxu0 0.0
        %1287 = vmatpush1.msra.mxu0 0.0
        %1288 = vmatprep.subr.mxu0 0.0
        %1289 = vmatpush1.msra.mxu0 0.0
        %1290 = vmatprep.subr.mxu0 0.0
        %1291 = vmatpush1.msra.mxu0 0.0
        %1292 = vmatprep.subr.mxu0 0.0
        %1293 = vmatpush1.msra.mxu0 0.0
        %1294 = vmatprep.mubr.f32.mxu0 0.0
        %v1295 = vand.u32 %v281, 4294901760
        %v1296 = vsub.f32 %v281, %v1295
        %1297 = vmatmul.mubr.f32.gmra.mrb[0].mxu0 %v1296
        %v1298 = vpop.f32.mrb[0].mxu0
        %v1299 = vadd.f32 %v1195, %v1298
        %v1300 = vpop.f32.mrb[0].mxu0
        %1301 = vdwg.mxu0
        %1302 = vmatprep.subr.mxu0 0.0
        %v1303 = vand.u32 %v282, 4294901760
        %1304 = vmatpush1.msra.mxu0 %v1303
        %1305 = vmatprep.subr.mxu0 0.0
        %v1306 = vand.u32 %v283, 4294901760
        %1307 = vmatpush1.msra.mxu0 %v1306
        %1308 = vmatprep.subr.mxu0 0.0
        %v1309 = vand.u32 %v284, 4294901760
        %1310 = vmatpush1.msra.mxu0 %v1309
        %1311 = vmatprep.subr.mxu0 0.0
        %v1312 = vand.u32 %v285, 4294901760
        %1313 = vmatpush1.msra.mxu0 %v1312
        %1314 = vmatprep.subr.mxu0 0.0
        %v1315 = vand.u32 %v286, 4294901760
        %1316 = vmatpush1.msra.mxu0 %v1315
        %1317 = vmatprep.subr.mxu0 0.0
        %v1318 = vand.u32 %v287, 4294901760
        %1319 = vmatpush1.msra.mxu0 %v1318
        %1320 = vmatprep.subr.mxu0 0.0
        %v1321 = vand.u32 %v288, 4294901760
        %1322 = vmatpush1.msra.mxu0 %v1321
        %1323 = vmatprep.subr.mxu0 0.0
        %v1324 = vand.u32 %v289, 4294901760
        %1325 = vmatpush1.msra.mxu0 %v1324
        %1326 = vmatprep.subr.mxu0 0.0
        %v1327 = vand.u32 %v290, 4294901760
        %1328 = vmatpush1.msra.mxu0 %v1327
        %1329 = vmatprep.subr.mxu0 0.0
        %v1330 = vand.u32 %v291, 4294901760
        %1331 = vmatpush1.msra.mxu0 %v1330
        %1332 = vmatprep.subr.mxu0 0.0
        %v1333 = vand.u32 %v292, 4294901760
        %1334 = vmatpush1.msra.mxu0 %v1333
        %1335 = vmatprep.subr.mxu0 0.0
        %v1336 = vand.u32 %v293, 4294901760
        %1337 = vmatpush1.msra.mxu0 %v1336
        %1338 = vmatprep.subr.mxu0 0.0
        %v1339 = vand.u32 %v294, 4294901760
        %1340 = vmatpush1.msra.mxu0 %v1339
        %1341 = vmatprep.subr.mxu0 0.0
        %v1342 = vand.u32 %v295, 4294901760
        %1343 = vmatpush1.msra.mxu0 %v1342
        %1344 = vmatprep.subr.mxu0 0.0
        %v1345 = vand.u32 %v296, 4294901760
        %1346 = vmatpush1.msra.mxu0 %v1345
        %1347 = vmatprep.subr.mxu0 0.0
        %v1348 = vand.u32 %v297, 4294901760
        %1349 = vmatpush1.msra.mxu0 %v1348
        %1350 = vmatprep.subr.mxu0 0.0
        %1351 = vmatpush1.msra.mxu0 0.0
        %1352 = vmatprep.subr.mxu0 0.0
        %1353 = vmatpush1.msra.mxu0 0.0
        %1354 = vmatprep.subr.mxu0 0.0
        %1355 = vmatpush1.msra.mxu0 0.0
        %1356 = vmatprep.subr.mxu0 0.0
        %1357 = vmatpush1.msra.mxu0 0.0
        %1358 = vmatprep.subr.mxu0 0.0
        %1359 = vmatpush1.msra.mxu0 0.0
        %1360 = vmatprep.subr.mxu0 0.0
        %1361 = vmatpush1.msra.mxu0 0.0
        %1362 = vmatprep.subr.mxu0 0.0
        %1363 = vmatpush1.msra.mxu0 0.0
        %1364 = vmatprep.subr.mxu0 0.0
        %1365 = vmatpush1.msra.mxu0 0.0
        %1366 = vmatprep.subr.mxu0 0.0
        %1367 = vmatpush1.msra.mxu0 0.0
        %1368 = vmatprep.subr.mxu0 0.0
        %1369 = vmatpush1.msra.mxu0 0.0
        %1370 = vmatprep.subr.mxu0 0.0
        %1371 = vmatpush1.msra.mxu0 0.0
        %1372 = vmatprep.subr.mxu0 0.0
        %1373 = vmatpush1.msra.mxu0 0.0
        %1374 = vmatprep.subr.mxu0 0.0
        %1375 = vmatpush1.msra.mxu0 0.0
        %1376 = vmatprep.subr.mxu0 0.0
        %1377 = vmatpush1.msra.mxu0 0.0
        %1378 = vmatprep.subr.mxu0 0.0
        %1379 = vmatpush1.msra.mxu0 0.0
        %1380 = vmatprep.subr.mxu0 0.0
        %1381 = vmatpush1.msra.mxu0 0.0
        %1382 = vmatprep.mubr.f32.mxu0 0.0
        %v1383 = vand.u32 %v281, 4294901760
        %v1384 = vsub.f32 %v281, %v1383
        %v1385 = vand.u32 %v1384, 4294901760
        %1386 = vmatmul.mubr.f32.gmra.mrb[0].mxu0 %v1385
        %v1387 = vpop.f32.mrb[0].mxu0
        %v1388 = vadd.f32 %v1299, %v1387
        %v1389 = vpop.f32.mrb[0].mxu0
        %1390 = vdwg.mxu0
        %1391 = vmatprep.subr.mxu0 0.0
        %v1392 = vand.u32 %v282, 4294901760
        %v1393 = vsub.f32 %v282, %v1392
        %v1394 = vand.u32 %v1393, 4294901760
        %1395 = vmatpush1.msra.mxu0 %v1394
        %1396 = vmatprep.subr.mxu0 0.0
        %v1397 = vand.u32 %v283, 4294901760
        %v1398 = vsub.f32 %v283, %v1397
        %v1399 = vand.u32 %v1398, 4294901760
        %1400 = vmatpush1.msra.mxu0 %v1399
        %1401 = vmatprep.subr.mxu0 0.0
        %v1402 = vand.u32 %v284, 4294901760
        %v1403 = vsub.f32 %v284, %v1402
        %v1404 = vand.u32 %v1403, 4294901760
        %1405 = vmatpush1.msra.mxu0 %v1404
        %1406 = vmatprep.subr.mxu0 0.0
        %v1407 = vand.u32 %v285, 4294901760
        %v1408 = vsub.f32 %v285, %v1407
        %v1409 = vand.u32 %v1408, 4294901760
        %1410 = vmatpush1.msra.mxu0 %v1409
        %1411 = vmatprep.subr.mxu0 0.0
        %v1412 = vand.u32 %v286, 4294901760
        %v1413 = vsub.f32 %v286, %v1412
        %v1414 = vand.u32 %v1413, 4294901760
        %1415 = vmatpush1.msra.mxu0 %v1414
        %1416 = vmatprep.subr.mxu0 0.0
        %v1417 = vand.u32 %v287, 4294901760
        %v1418 = vsub.f32 %v287, %v1417
        %v1419 = vand.u32 %v1418, 4294901760
        %1420 = vmatpush1.msra.mxu0 %v1419
        %1421 = vmatprep.subr.mxu0 0.0
        %v1422 = vand.u32 %v288, 4294901760
        %v1423 = vsub.f32 %v288, %v1422
        %v1424 = vand.u32 %v1423, 4294901760
        %1425 = vmatpush1.msra.mxu0 %v1424
        %1426 = vmatprep.subr.mxu0 0.0
        %v1427 = vand.u32 %v289, 4294901760
        %v1428 = vsub.f32 %v289, %v1427
        %v1429 = vand.u32 %v1428, 4294901760
        %1430 = vmatpush1.msra.mxu0 %v1429
        %1431 = vmatprep.subr.mxu0 0.0
        %v1432 = vand.u32 %v290, 4294901760
        %v1433 = vsub.f32 %v290, %v1432
        %v1434 = vand.u32 %v1433, 4294901760
        %1435 = vmatpush1.msra.mxu0 %v1434
        %1436 = vmatprep.subr.mxu0 0.0
        %v1437 = vand.u32 %v291, 4294901760
        %v1438 = vsub.f32 %v291, %v1437
        %v1439 = vand.u32 %v1438, 4294901760
        %1440 = vmatpush1.msra.mxu0 %v1439
        %1441 = vmatprep.subr.mxu0 0.0
        %v1442 = vand.u32 %v292, 4294901760
        %v1443 = vsub.f32 %v292, %v1442
        %v1444 = vand.u32 %v1443, 4294901760
        %1445 = vmatpush1.msra.mxu0 %v1444
        %1446 = vmatprep.subr.mxu0 0.0
        %v1447 = vand.u32 %v293, 4294901760
        %v1448 = vsub.f32 %v293, %v1447
        %v1449 = vand.u32 %v1448, 4294901760
        %1450 = vmatpush1.msra.mxu0 %v1449
        %1451 = vmatprep.subr.mxu0 0.0
        %v1452 = vand.u32 %v294, 4294901760
        %v1453 = vsub.f32 %v294, %v1452
        %v1454 = vand.u32 %v1453, 4294901760
        %1455 = vmatpush1.msra.mxu0 %v1454
        %1456 = vmatprep.subr.mxu0 0.0
        %v1457 = vand.u32 %v295, 4294901760
        %v1458 = vsub.f32 %v295, %v1457
        %v1459 = vand.u32 %v1458, 4294901760
        %1460 = vmatpush1.msra.mxu0 %v1459
        %1461 = vmatprep.subr.mxu0 0.0
        %v1462 = vand.u32 %v296, 4294901760
        %v1463 = vsub.f32 %v296, %v1462
        %v1464 = vand.u32 %v1463, 4294901760
        %1465 = vmatpush1.msra.mxu0 %v1464
        %1466 = vmatprep.subr.mxu0 0.0
        %v1467 = vand.u32 %v297, 4294901760
        %v1468 = vsub.f32 %v297, %v1467
        %v1469 = vand.u32 %v1468, 4294901760
        %1470 = vmatpush1.msra.mxu0 %v1469
        %1471 = vmatprep.subr.mxu0 0.0
        %1472 = vmatpush1.msra.mxu0 0.0
        %1473 = vmatprep.subr.mxu0 0.0
        %1474 = vmatpush1.msra.mxu0 0.0
        %1475 = vmatprep.subr.mxu0 0.0
        %1476 = vmatpush1.msra.mxu0 0.0
        %1477 = vmatprep.subr.mxu0 0.0
        %1478 = vmatpush1.msra.mxu0 0.0
        %1479 = vmatprep.subr.mxu0 0.0
        %1480 = vmatpush1.msra.mxu0 0.0
        %1481 = vmatprep.subr.mxu0 0.0
        %1482 = vmatpush1.msra.mxu0 0.0
        %1483 = vmatprep.subr.mxu0 0.0
        %1484 = vmatpush1.msra.mxu0 0.0
        %1485 = vmatprep.subr.mxu0 0.0
        %1486 = vmatpush1.msra.mxu0 0.0
        %1487 = vmatprep.subr.mxu0 0.0
        %1488 = vmatpush1.msra.mxu0 0.0
        %1489 = vmatprep.subr.mxu0 0.0
        %1490 = vmatpush1.msra.mxu0 0.0
        %1491 = vmatprep.subr.mxu0 0.0
        %1492 = vmatpush1.msra.mxu0 0.0
        %1493 = vmatprep.subr.mxu0 0.0
        %1494 = vmatpush1.msra.mxu0 0.0
        %1495 = vmatprep.subr.mxu0 0.0
        %1496 = vmatpush1.msra.mxu0 0.0
        %1497 = vmatprep.subr.mxu0 0.0
        %1498 = vmatpush1.msra.mxu0 0.0
        %1499 = vmatprep.subr.mxu0 0.0
        %1500 = vmatpush1.msra.mxu0 0.0
        %1501 = vmatprep.subr.mxu0 0.0
        %1502 = vmatpush1.msra.mxu0 0.0
        %1503 = vmatprep.mubr.f32.mxu0 0.0
        %v1504 = vand.u32 %v281, 4294901760
        %1505 = vmatmul.mubr.f32.gmra.mrb[0].mxu0 %v1504
        %v1506 = vpop.f32.mrb[0].mxu0
        %v1507 = vadd.f32 %v1388, %v1506
        %v1508 = vpop.f32.mrb[0].mxu0
        %1509 = vdwg.mxu0
        %1510 = vmatprep.subr.mxu0 0.0
        %v1511 = vand.u32 %v282, 4294901760
        %1512 = vmatpush1.msra.mxu0 %v1511
        %1513 = vmatprep.subr.mxu0 0.0
        %v1514 = vand.u32 %v283, 4294901760
        %1515 = vmatpush1.msra.mxu0 %v1514
        %1516 = vmatprep.subr.mxu0 0.0
        %v1517 = vand.u32 %v284, 4294901760
        %1518 = vmatpush1.msra.mxu0 %v1517
        %1519 = vmatprep.subr.mxu0 0.0
        %v1520 = vand.u32 %v285, 4294901760
        %1521 = vmatpush1.msra.mxu0 %v1520
        %1522 = vmatprep.subr.mxu0 0.0
        %v1523 = vand.u32 %v286, 4294901760
        %1524 = vmatpush1.msra.mxu0 %v1523
        %1525 = vmatprep.subr.mxu0 0.0
        %v1526 = vand.u32 %v287, 4294901760
        %1527 = vmatpush1.msra.mxu0 %v1526
        %1528 = vmatprep.subr.mxu0 0.0
        %v1529 = vand.u32 %v288, 4294901760
        %1530 = vmatpush1.msra.mxu0 %v1529
        %1531 = vmatprep.subr.mxu0 0.0
        %v1532 = vand.u32 %v289, 4294901760
        %1533 = vmatpush1.msra.mxu0 %v1532
        %1534 = vmatprep.subr.mxu0 0.0
        %v1535 = vand.u32 %v290, 4294901760
        %1536 = vmatpush1.msra.mxu0 %v1535
        %1537 = vmatprep.subr.mxu0 0.0
        %v1538 = vand.u32 %v291, 4294901760
        %1539 = vmatpush1.msra.mxu0 %v1538
        %1540 = vmatprep.subr.mxu0 0.0
        %v1541 = vand.u32 %v292, 4294901760
        %1542 = vmatpush1.msra.mxu0 %v1541
        %1543 = vmatprep.subr.mxu0 0.0
        %v1544 = vand.u32 %v293, 4294901760
        %1545 = vmatpush1.msra.mxu0 %v1544
        %1546 = vmatprep.subr.mxu0 0.0
        %v1547 = vand.u32 %v294, 4294901760
        %1548 = vmatpush1.msra.mxu0 %v1547
        %1549 = vmatprep.subr.mxu0 0.0
        %v1550 = vand.u32 %v295, 4294901760
        %1551 = vmatpush1.msra.mxu0 %v1550
        %1552 = vmatprep.subr.mxu0 0.0
        %v1553 = vand.u32 %v296, 4294901760
        %1554 = vmatpush1.msra.mxu0 %v1553
        %1555 = vmatprep.subr.mxu0 0.0
        %v1556 = vand.u32 %v297, 4294901760
        %1557 = vmatpush1.msra.mxu0 %v1556
        %1558 = vmatprep.subr.mxu0 0.0
        %1559 = vmatpush1.msra.mxu0 0.0
        %1560 = vmatprep.subr.mxu0 0.0
        %1561 = vmatpush1.msra.mxu0 0.0
        %1562 = vmatprep.subr.mxu0 0.0
        %1563 = vmatpush1.msra.mxu0 0.0
        %1564 = vmatprep.subr.mxu0 0.0
        %1565 = vmatpush1.msra.mxu0 0.0
        %1566 = vmatprep.subr.mxu0 0.0
        %1567 = vmatpush1.msra.mxu0 0.0
        %1568 = vmatprep.subr.mxu0 0.0
        %1569 = vmatpush1.msra.mxu0 0.0
        %1570 = vmatprep.subr.mxu0 0.0
        %1571 = vmatpush1.msra.mxu0 0.0
        %1572 = vmatprep.subr.mxu0 0.0
        %1573 = vmatpush1.msra.mxu0 0.0
        %1574 = vmatprep.subr.mxu0 0.0
        %1575 = vmatpush1.msra.mxu0 0.0
        %1576 = vmatprep.subr.mxu0 0.0
        %1577 = vmatpush1.msra.mxu0 0.0
        %1578 = vmatprep.subr.mxu0 0.0
        %1579 = vmatpush1.msra.mxu0 0.0
        %1580 = vmatprep.subr.mxu0 0.0
        %1581 = vmatpush1.msra.mxu0 0.0
        %1582 = vmatprep.subr.mxu0 0.0
        %1583 = vmatpush1.msra.mxu0 0.0
        %1584 = vmatprep.subr.mxu0 0.0
        %1585 = vmatpush1.msra.mxu0 0.0
        %1586 = vmatprep.subr.mxu0 0.0
        %1587 = vmatpush1.msra.mxu0 0.0
        %1588 = vmatprep.subr.mxu0 0.0
        %1589 = vmatpush1.msra.mxu0 0.0
        %1590 = vmatprep.mubr.f32.mxu0 0.0
        %v1591 = vand.u32 %v281, 4294901760
        %1592 = vmatmul.mubr.f32.gmra.mrb[0].mxu0 %v1591
        %v1593 = vpop.f32.mrb[0].mxu0
        %v1594 = vadd.f32 %v1507, %v1593
        %v1595 = vpop.f32.mrb[0].mxu0
        %1596 = vdwg.mxu0
        %v1597 = vld [vmem:[#allocation3] sm:$0xff]
        %v1598 = vld [vmem:[#allocation10] sm:$0xff]
        %v1599 = vld [vmem:[#allocation10 + $0x8] sm:$0xff]
        %v1600 = vld [vmem:[#allocation10 + $0x10] sm:$0xff]
        %v1601 = vld [vmem:[#allocation10 + $0x18] sm:$0xff]
        %v1602 = vld [vmem:[#allocation10 + $0x20] sm:$0xff]
        %v1603 = vld [vmem:[#allocation10 + $0x28] sm:$0xff]
        %v1604 = vld [vmem:[#allocation10 + $0x30] sm:$0xff]
        %v1605 = vld [vmem:[#allocation10 + $0x38] sm:$0xff]
        %v1606 = vld [vmem:[#allocation10 + $0x40] sm:$0xff]
        %v1607 = vld [vmem:[#allocation10 + $0x48] sm:$0xff]
        %v1608 = vld [vmem:[#allocation10 + $0x50] sm:$0xff]
        %v1609 = vld [vmem:[#allocation10 + $0x58] sm:$0xff]
        %v1610 = vld [vmem:[#allocation10 + $0x60] sm:$0xff]
        %v1611 = vld [vmem:[#allocation10 + $0x68] sm:$0xff]
        %v1612 = vld [vmem:[#allocation10 + $0x70] sm:$0xff]
        %v1613 = vld [vmem:[#allocation10 + $0x78] sm:$0xff]
        %1614 = vmatprep.subr.mxu0 0.0
        %v1615 = vand.u32 %v1598, 4294901760
        %1616 = vmatpush1.msra.mxu0 %v1615
        %1617 = vmatprep.subr.mxu0 0.0
        %v1618 = vand.u32 %v1599, 4294901760
        %1619 = vmatpush1.msra.mxu0 %v1618
        %1620 = vmatprep.subr.mxu0 0.0
        %v1621 = vand.u32 %v1600, 4294901760
        %1622 = vmatpush1.msra.mxu0 %v1621
        %1623 = vmatprep.subr.mxu0 0.0
        %v1624 = vand.u32 %v1601, 4294901760
        %1625 = vmatpush1.msra.mxu0 %v1624
        %1626 = vmatprep.subr.mxu0 0.0
        %v1627 = vand.u32 %v1602, 4294901760
        %1628 = vmatpush1.msra.mxu0 %v1627
        %1629 = vmatprep.subr.mxu0 0.0
        %v1630 = vand.u32 %v1603, 4294901760
        %1631 = vmatpush1.msra.mxu0 %v1630
        %1632 = vmatprep.subr.mxu0 0.0
        %v1633 = vand.u32 %v1604, 4294901760
        %1634 = vmatpush1.msra.mxu0 %v1633
        %1635 = vmatprep.subr.mxu0 0.0
        %v1636 = vand.u32 %v1605, 4294901760
        %1637 = vmatpush1.msra.mxu0 %v1636
        %1638 = vmatprep.subr.mxu0 0.0
        %v1639 = vand.u32 %v1606, 4294901760
        %1640 = vmatpush1.msra.mxu0 %v1639
        %1641 = vmatprep.subr.mxu0 0.0
        %v1642 = vand.u32 %v1607, 4294901760
        %1643 = vmatpush1.msra.mxu0 %v1642
        %1644 = vmatprep.subr.mxu0 0.0
        %v1645 = vand.u32 %v1608, 4294901760
        %1646 = vmatpush1.msra.mxu0 %v1645
        %1647 = vmatprep.subr.mxu0 0.0
        %v1648 = vand.u32 %v1609, 4294901760
        %1649 = vmatpush1.msra.mxu0 %v1648
        %1650 = vmatprep.subr.mxu0 0.0
        %v1651 = vand.u32 %v1610, 4294901760
        %1652 = vmatpush1.msra.mxu0 %v1651
        %1653 = vmatprep.subr.mxu0 0.0
        %v1654 = vand.u32 %v1611, 4294901760
        %1655 = vmatpush1.msra.mxu0 %v1654
        %1656 = vmatprep.subr.mxu0 0.0
        %v1657 = vand.u32 %v1612, 4294901760
        %1658 = vmatpush1.msra.mxu0 %v1657
        %1659 = vmatprep.subr.mxu0 0.0
        %v1660 = vand.u32 %v1613, 4294901760
        %1661 = vmatpush1.msra.mxu0 %v1660
        %1662 = vmatprep.subr.mxu0 0.0
        %1663 = vmatpush1.msra.mxu0 0.0
        %1664 = vmatprep.subr.mxu0 0.0
        %1665 = vmatpush1.msra.mxu0 0.0
        %1666 = vmatprep.subr.mxu0 0.0
        %1667 = vmatpush1.msra.mxu0 0.0
        %1668 = vmatprep.subr.mxu0 0.0
        %1669 = vmatpush1.msra.mxu0 0.0
        %1670 = vmatprep.subr.mxu0 0.0
        %1671 = vmatpush1.msra.mxu0 0.0
        %1672 = vmatprep.subr.mxu0 0.0
        %1673 = vmatpush1.msra.mxu0 0.0
        %1674 = vmatprep.subr.mxu0 0.0
        %1675 = vmatpush1.msra.mxu0 0.0
        %1676 = vmatprep.subr.mxu0 0.0
        %1677 = vmatpush1.msra.mxu0 0.0
        %1678 = vmatprep.subr.mxu0 0.0
        %1679 = vmatpush1.msra.mxu0 0.0
        %1680 = vmatprep.subr.mxu0 0.0
        %1681 = vmatpush1.msra.mxu0 0.0
        %1682 = vmatprep.subr.mxu0 0.0
        %1683 = vmatpush1.msra.mxu0 0.0
        %1684 = vmatprep.subr.mxu0 0.0
        %1685 = vmatpush1.msra.mxu0 0.0
        %1686 = vmatprep.subr.mxu0 0.0
        %1687 = vmatpush1.msra.mxu0 0.0
        %1688 = vmatprep.subr.mxu0 0.0
        %1689 = vmatpush1.msra.mxu0 0.0
        %1690 = vmatprep.subr.mxu0 0.0
        %1691 = vmatpush1.msra.mxu0 0.0
        %1692 = vmatprep.subr.mxu0 0.0
        %1693 = vmatpush1.msra.mxu0 0.0
        %1694 = vmatprep.mubr.f32.mxu0 0.0
        %v1695 = vand.u32 %v1597, 4294901760
        %v1696 = vsub.f32 %v1597, %v1695
        %v1697 = vand.u32 %v1696, 4294901760
        %v1698 = vsub.f32 %v1696, %v1697
        %v1699 = vand.u32 %v1698, 4294901760
        %1700 = vmatmul.mubr.f32.gmra.mrb[0].mxu0 %v1699
        %v1701 = vpop.f32.mrb[0].mxu0
        %v1702 = vadd.f32 0.0, %v1701
        %v1703 = vpop.f32.mrb[0].mxu0
        %1704 = vdwg.mxu0
        %1705 = vmatprep.subr.mxu0 0.0
        %v1706 = vand.u32 %v1598, 4294901760
        %v1707 = vsub.f32 %v1598, %v1706
        %v1708 = vand.u32 %v1707, 4294901760
        %v1709 = vsub.f32 %v1707, %v1708
        %v1710 = vand.u32 %v1709, 4294901760
        %1711 = vmatpush1.msra.mxu0 %v1710
        %1712 = vmatprep.subr.mxu0 0.0
        %v1713 = vand.u32 %v1599, 4294901760
        %v1714 = vsub.f32 %v1599, %v1713
        %v1715 = vand.u32 %v1714, 4294901760
        %v1716 = vsub.f32 %v1714, %v1715
        %v1717 = vand.u32 %v1716, 4294901760
        %1718 = vmatpush1.msra.mxu0 %v1717
        %1719 = vmatprep.subr.mxu0 0.0
        %v1720 = vand.u32 %v1600, 4294901760
        %v1721 = vsub.f32 %v1600, %v1720
        %v1722 = vand.u32 %v1721, 4294901760
        %v1723 = vsub.f32 %v1721, %v1722
        %v1724 = vand.u32 %v1723, 4294901760
        %1725 = vmatpush1.msra.mxu0 %v1724
        %1726 = vmatprep.subr.mxu0 0.0
        %v1727 = vand.u32 %v1601, 4294901760
        %v1728 = vsub.f32 %v1601, %v1727
        %v1729 = vand.u32 %v1728, 4294901760
        %v1730 = vsub.f32 %v1728, %v1729
        %v1731 = vand.u32 %v1730, 4294901760
        %1732 = vmatpush1.msra.mxu0 %v1731
        %1733 = vmatprep.subr.mxu0 0.0
        %v1734 = vand.u32 %v1602, 4294901760
        %v1735 = vsub.f32 %v1602, %v1734
        %v1736 = vand.u32 %v1735, 4294901760
        %v1737 = vsub.f32 %v1735, %v1736
        %v1738 = vand.u32 %v1737, 4294901760
        %1739 = vmatpush1.msra.mxu0 %v1738
        %1740 = vmatprep.subr.mxu0 0.0
        %v1741 = vand.u32 %v1603, 4294901760
        %v1742 = vsub.f32 %v1603, %v1741
        %v1743 = vand.u32 %v1742, 4294901760
        %v1744 = vsub.f32 %v1742, %v1743
        %v1745 = vand.u32 %v1744, 4294901760
        %1746 = vmatpush1.msra.mxu0 %v1745
        %1747 = vmatprep.subr.mxu0 0.0
        %v1748 = vand.u32 %v1604, 4294901760
        %v1749 = vsub.f32 %v1604, %v1748
        %v1750 = vand.u32 %v1749, 4294901760
        %v1751 = vsub.f32 %v1749, %v1750
        %v1752 = vand.u32 %v1751, 4294901760
        %1753 = vmatpush1.msra.mxu0 %v1752
        %1754 = vmatprep.subr.mxu0 0.0
        %v1755 = vand.u32 %v1605, 4294901760
        %v1756 = vsub.f32 %v1605, %v1755
        %v1757 = vand.u32 %v1756, 4294901760
        %v1758 = vsub.f32 %v1756, %v1757
        %v1759 = vand.u32 %v1758, 4294901760
        %1760 = vmatpush1.msra.mxu0 %v1759
        %1761 = vmatprep.subr.mxu0 0.0
        %v1762 = vand.u32 %v1606, 4294901760
        %v1763 = vsub.f32 %v1606, %v1762
        %v1764 = vand.u32 %v1763, 4294901760
        %v1765 = vsub.f32 %v1763, %v1764
        %v1766 = vand.u32 %v1765, 4294901760
        %1767 = vmatpush1.msra.mxu0 %v1766
        %1768 = vmatprep.subr.mxu0 0.0
        %v1769 = vand.u32 %v1607, 4294901760
        %v1770 = vsub.f32 %v1607, %v1769
        %v1771 = vand.u32 %v1770, 4294901760
        %v1772 = vsub.f32 %v1770, %v1771
        %v1773 = vand.u32 %v1772, 4294901760
        %1774 = vmatpush1.msra.mxu0 %v1773
        %1775 = vmatprep.subr.mxu0 0.0
        %v1776 = vand.u32 %v1608, 4294901760
        %v1777 = vsub.f32 %v1608, %v1776
        %v1778 = vand.u32 %v1777, 4294901760
        %v1779 = vsub.f32 %v1777, %v1778
        %v1780 = vand.u32 %v1779, 4294901760
        %1781 = vmatpush1.msra.mxu0 %v1780
        %1782 = vmatprep.subr.mxu0 0.0
        %v1783 = vand.u32 %v1609, 4294901760
        %v1784 = vsub.f32 %v1609, %v1783
        %v1785 = vand.u32 %v1784, 4294901760
        %v1786 = vsub.f32 %v1784, %v1785
        %v1787 = vand.u32 %v1786, 4294901760
        %1788 = vmatpush1.msra.mxu0 %v1787
        %1789 = vmatprep.subr.mxu0 0.0
        %v1790 = vand.u32 %v1610, 4294901760
        %v1791 = vsub.f32 %v1610, %v1790
        %v1792 = vand.u32 %v1791, 4294901760
        %v1793 = vsub.f32 %v1791, %v1792
        %v1794 = vand.u32 %v1793, 4294901760
        %1795 = vmatpush1.msra.mxu0 %v1794
        %1796 = vmatprep.subr.mxu0 0.0
        %v1797 = vand.u32 %v1611, 4294901760
        %v1798 = vsub.f32 %v1611, %v1797
        %v1799 = vand.u32 %v1798, 4294901760
        %v1800 = vsub.f32 %v1798, %v1799
        %v1801 = vand.u32 %v1800, 4294901760
        %1802 = vmatpush1.msra.mxu0 %v1801
        %1803 = vmatprep.subr.mxu0 0.0
        %v1804 = vand.u32 %v1612, 4294901760
        %v1805 = vsub.f32 %v1612, %v1804
        %v1806 = vand.u32 %v1805, 4294901760
        %v1807 = vsub.f32 %v1805, %v1806
        %v1808 = vand.u32 %v1807, 4294901760
        %1809 = vmatpush1.msra.mxu0 %v1808
        %1810 = vmatprep.subr.mxu0 0.0
        %v1811 = vand.u32 %v1613, 4294901760
        %v1812 = vsub.f32 %v1613, %v1811
        %v1813 = vand.u32 %v1812, 4294901760
        %v1814 = vsub.f32 %v1812, %v1813
        %v1815 = vand.u32 %v1814, 4294901760
        %1816 = vmatpush1.msra.mxu0 %v1815
        %1817 = vmatprep.subr.mxu0 0.0
        %1818 = vmatpush1.msra.mxu0 0.0
        %1819 = vmatprep.subr.mxu0 0.0
        %1820 = vmatpush1.msra.mxu0 0.0
        %1821 = vmatprep.subr.mxu0 0.0
        %1822 = vmatpush1.msra.mxu0 0.0
        %1823 = vmatprep.subr.mxu0 0.0
        %1824 = vmatpush1.msra.mxu0 0.0
        %1825 = vmatprep.subr.mxu0 0.0
        %1826 = vmatpush1.msra.mxu0 0.0
        %1827 = vmatprep.subr.mxu0 0.0
        %1828 = vmatpush1.msra.mxu0 0.0
        %1829 = vmatprep.subr.mxu0 0.0
        %1830 = vmatpush1.msra.mxu0 0.0
        %1831 = vmatprep.subr.mxu0 0.0
        %1832 = vmatpush1.msra.mxu0 0.0
        %1833 = vmatprep.subr.mxu0 0.0
        %1834 = vmatpush1.msra.mxu0 0.0
        %1835 = vmatprep.subr.mxu0 0.0
        %1836 = vmatpush1.msra.mxu0 0.0
        %1837 = vmatprep.subr.mxu0 0.0
        %1838 = vmatpush1.msra.mxu0 0.0
        %1839 = vmatprep.subr.mxu0 0.0
        %1840 = vmatpush1.msra.mxu0 0.0
        %1841 = vmatprep.subr.mxu0 0.0
        %1842 = vmatpush1.msra.mxu0 0.0
        %1843 = vmatprep.subr.mxu0 0.0
        %1844 = vmatpush1.msra.mxu0 0.0
        %1845 = vmatprep.subr.mxu0 0.0
        %1846 = vmatpush1.msra.mxu0 0.0
        %1847 = vmatprep.subr.mxu0 0.0
        %1848 = vmatpush1.msra.mxu0 0.0
        %1849 = vmatprep.mubr.f32.mxu0 0.0
        %v1850 = vand.u32 %v1597, 4294901760
        %1851 = vmatmul.mubr.f32.gmra.mrb[0].mxu0 %v1850
        %v1852 = vpop.f32.mrb[0].mxu0
        %v1853 = vadd.f32 %v1702, %v1852
        %v1854 = vpop.f32.mrb[0].mxu0
        %1855 = vdwg.mxu0
        %1856 = vmatprep.subr.mxu0 0.0
        %v1857 = vand.u32 %v1598, 4294901760
        %v1858 = vsub.f32 %v1598, %v1857
        %1859 = vmatpush1.msra.mxu0 %v1858
        %1860 = vmatprep.subr.mxu0 0.0
        %v1861 = vand.u32 %v1599, 4294901760
        %v1862 = vsub.f32 %v1599, %v1861
        %1863 = vmatpush1.msra.mxu0 %v1862
        %1864 = vmatprep.subr.mxu0 0.0
        %v1865 = vand.u32 %v1600, 4294901760
        %v1866 = vsub.f32 %v1600, %v1865
        %1867 = vmatpush1.msra.mxu0 %v1866
        %1868 = vmatprep.subr.mxu0 0.0
        %v1869 = vand.u32 %v1601, 4294901760
        %v1870 = vsub.f32 %v1601, %v1869
        %1871 = vmatpush1.msra.mxu0 %v1870
        %1872 = vmatprep.subr.mxu0 0.0
        %v1873 = vand.u32 %v1602, 4294901760
        %v1874 = vsub.f32 %v1602, %v1873
        %1875 = vmatpush1.msra.mxu0 %v1874
        %1876 = vmatprep.subr.mxu0 0.0
        %v1877 = vand.u32 %v1603, 4294901760
        %v1878 = vsub.f32 %v1603, %v1877
        %1879 = vmatpush1.msra.mxu0 %v1878
        %1880 = vmatprep.subr.mxu0 0.0
        %v1881 = vand.u32 %v1604, 4294901760
        %v1882 = vsub.f32 %v1604, %v1881
        %1883 = vmatpush1.msra.mxu0 %v1882
        %1884 = vmatprep.subr.mxu0 0.0
        %v1885 = vand.u32 %v1605, 4294901760
        %v1886 = vsub.f32 %v1605, %v1885
        %1887 = vmatpush1.msra.mxu0 %v1886
        %1888 = vmatprep.subr.mxu0 0.0
        %v1889 = vand.u32 %v1606, 4294901760
        %v1890 = vsub.f32 %v1606, %v1889
        %1891 = vmatpush1.msra.mxu0 %v1890
        %1892 = vmatprep.subr.mxu0 0.0
        %v1893 = vand.u32 %v1607, 4294901760
        %v1894 = vsub.f32 %v1607, %v1893
        %1895 = vmatpush1.msra.mxu0 %v1894
        %1896 = vmatprep.subr.mxu0 0.0
        %v1897 = vand.u32 %v1608, 4294901760
        %v1898 = vsub.f32 %v1608, %v1897
        %1899 = vmatpush1.msra.mxu0 %v1898
        %1900 = vmatprep.subr.mxu0 0.0
        %v1901 = vand.u32 %v1609, 4294901760
        %v1902 = vsub.f32 %v1609, %v1901
        %1903 = vmatpush1.msra.mxu0 %v1902
        %1904 = vmatprep.subr.mxu0 0.0
        %v1905 = vand.u32 %v1610, 4294901760
        %v1906 = vsub.f32 %v1610, %v1905
        %1907 = vmatpush1.msra.mxu0 %v1906
        %1908 = vmatprep.subr.mxu0 0.0
        %v1909 = vand.u32 %v1611, 4294901760
        %v1910 = vsub.f32 %v1611, %v1909
        %1911 = vmatpush1.msra.mxu0 %v1910
        %1912 = vmatprep.subr.mxu0 0.0
        %v1913 = vand.u32 %v1612, 4294901760
        %v1914 = vsub.f32 %v1612, %v1913
        %1915 = vmatpush1.msra.mxu0 %v1914
        %1916 = vmatprep.subr.mxu0 0.0
        %v1917 = vand.u32 %v1613, 4294901760
        %v1918 = vsub.f32 %v1613, %v1917
        %1919 = vmatpush1.msra.mxu0 %v1918
        %1920 = vmatprep.subr.mxu0 0.0
        %1921 = vmatpush1.msra.mxu0 0.0
        %1922 = vmatprep.subr.mxu0 0.0
        %1923 = vmatpush1.msra.mxu0 0.0
        %1924 = vmatprep.subr.mxu0 0.0
        %1925 = vmatpush1.msra.mxu0 0.0
        %1926 = vmatprep.subr.mxu0 0.0
        %1927 = vmatpush1.msra.mxu0 0.0
        %1928 = vmatprep.subr.mxu0 0.0
        %1929 = vmatpush1.msra.mxu0 0.0
        %1930 = vmatprep.subr.mxu0 0.0
        %1931 = vmatpush1.msra.mxu0 0.0
        %1932 = vmatprep.subr.mxu0 0.0
        %1933 = vmatpush1.msra.mxu0 0.0
        %1934 = vmatprep.subr.mxu0 0.0
        %1935 = vmatpush1.msra.mxu0 0.0
        %1936 = vmatprep.subr.mxu0 0.0
        %1937 = vmatpush1.msra.mxu0 0.0
        %1938 = vmatprep.subr.mxu0 0.0
        %1939 = vmatpush1.msra.mxu0 0.0
        %1940 = vmatprep.subr.mxu0 0.0
        %1941 = vmatpush1.msra.mxu0 0.0
        %1942 = vmatprep.subr.mxu0 0.0
        %1943 = vmatpush1.msra.mxu0 0.0
        %1944 = vmatprep.subr.mxu0 0.0
        %1945 = vmatpush1.msra.mxu0 0.0
        %1946 = vmatprep.subr.mxu0 0.0
        %1947 = vmatpush1.msra.mxu0 0.0
        %1948 = vmatprep.subr.mxu0 0.0
        %1949 = vmatpush1.msra.mxu0 0.0
        %1950 = vmatprep.subr.mxu0 0.0
        %1951 = vmatpush1.msra.mxu0 0.0
        %1952 = vmatprep.mubr.f32.mxu0 0.0
        %v1953 = vand.u32 %v1597, 4294901760
        %v1954 = vsub.f32 %v1597, %v1953
        %1955 = vmatmul.mubr.f32.gmra.mrb[0].mxu0 %v1954
        %v1956 = vpop.f32.mrb[0].mxu0
        %v1957 = vadd.f32 %v1853, %v1956
        %v1958 = vpop.f32.mrb[0].mxu0
        %1959 = vdwg.mxu0
        %1960 = vmatprep.subr.mxu0 0.0
        %v1961 = vand.u32 %v1598, 4294901760
        %1962 = vmatpush1.msra.mxu0 %v1961
        %1963 = vmatprep.subr.mxu0 0.0
        %v1964 = vand.u32 %v1599, 4294901760
        %1965 = vmatpush1.msra.mxu0 %v1964
        %1966 = vmatprep.subr.mxu0 0.0
        %v1967 = vand.u32 %v1600, 4294901760
        %1968 = vmatpush1.msra.mxu0 %v1967
        %1969 = vmatprep.subr.mxu0 0.0
        %v1970 = vand.u32 %v1601, 4294901760
        %1971 = vmatpush1.msra.mxu0 %v1970
        %1972 = vmatprep.subr.mxu0 0.0
        %v1973 = vand.u32 %v1602, 4294901760
        %1974 = vmatpush1.msra.mxu0 %v1973
        %1975 = vmatprep.subr.mxu0 0.0
        %v1976 = vand.u32 %v1603, 4294901760
        %1977 = vmatpush1.msra.mxu0 %v1976
        %1978 = vmatprep.subr.mxu0 0.0
        %v1979 = vand.u32 %v1604, 4294901760
        %1980 = vmatpush1.msra.mxu0 %v1979
        %1981 = vmatprep.subr.mxu0 0.0
        %v1982 = vand.u32 %v1605, 4294901760
        %1983 = vmatpush1.msra.mxu0 %v1982
        %1984 = vmatprep.subr.mxu0 0.0
        %v1985 = vand.u32 %v1606, 4294901760
        %1986 = vmatpush1.msra.mxu0 %v1985
        %1987 = vmatprep.subr.mxu0 0.0
        %v1988 = vand.u32 %v1607, 4294901760
        %1989 = vmatpush1.msra.mxu0 %v1988
        %1990 = vmatprep.subr.mxu0 0.0
        %v1991 = vand.u32 %v1608, 4294901760
        %1992 = vmatpush1.msra.mxu0 %v1991
        %1993 = vmatprep.subr.mxu0 0.0
        %v1994 = vand.u32 %v1609, 4294901760
        %1995 = vmatpush1.msra.mxu0 %v1994
        %1996 = vmatprep.subr.mxu0 0.0
        %v1997 = vand.u32 %v1610, 4294901760
        %1998 = vmatpush1.msra.mxu0 %v1997
        %1999 = vmatprep.subr.mxu0 0.0
        %v2000 = vand.u32 %v1611, 4294901760
        %2001 = vmatpush1.msra.mxu0 %v2000
        %2002 = vmatprep.subr.mxu0 0.0
        %v2003 = vand.u32 %v1612, 4294901760
        %2004 = vmatpush1.msra.mxu0 %v2003
        %2005 = vmatprep.subr.mxu0 0.0
        %v2006 = vand.u32 %v1613, 4294901760
        %2007 = vmatpush1.msra.mxu0 %v2006
        %2008 = vmatprep.subr.mxu0 0.0
        %2009 = vmatpush1.msra.mxu0 0.0
        %2010 = vmatprep.subr.mxu0 0.0
        %2011 = vmatpush1.msra.mxu0 0.0
        %2012 = vmatprep.subr.mxu0 0.0
        %2013 = vmatpush1.msra.mxu0 0.0
        %2014 = vmatprep.subr.mxu0 0.0
        %2015 = vmatpush1.msra.mxu0 0.0
        %2016 = vmatprep.subr.mxu0 0.0
        %2017 = vmatpush1.msra.mxu0 0.0
        %2018 = vmatprep.subr.mxu0 0.0
        %2019 = vmatpush1.msra.mxu0 0.0
        %2020 = vmatprep.subr.mxu0 0.0
        %2021 = vmatpush1.msra.mxu0 0.0
        %2022 = vmatprep.subr.mxu0 0.0
        %2023 = vmatpush1.msra.mxu0 0.0
        %2024 = vmatprep.subr.mxu0 0.0
        %2025 = vmatpush1.msra.mxu0 0.0
        %2026 = vmatprep.subr.mxu0 0.0
        %2027 = vmatpush1.msra.mxu0 0.0
        %2028 = vmatprep.subr.mxu0 0.0
        %2029 = vmatpush1.msra.mxu0 0.0
        %2030 = vmatprep.subr.mxu0 0.0
        %2031 = vmatpush1.msra.mxu0 0.0
        %2032 = vmatprep.subr.mxu0 0.0
        %2033 = vmatpush1.msra.mxu0 0.0
        %2034 = vmatprep.subr.mxu0 0.0
        %2035 = vmatpush1.msra.mxu0 0.0
        %2036 = vmatprep.subr.mxu0 0.0
        %2037 = vmatpush1.msra.mxu0 0.0
        %2038 = vmatprep.subr.mxu0 0.0
        %2039 = vmatpush1.msra.mxu0 0.0
        %2040 = vmatprep.mubr.f32.mxu0 0.0
        %v2041 = vand.u32 %v1597, 4294901760
        %v2042 = vsub.f32 %v1597, %v2041
        %v2043 = vand.u32 %v2042, 4294901760
        %2044 = vmatmul.mubr.f32.gmra.mrb[0].mxu0 %v2043
        %v2045 = vpop.f32.mrb[0].mxu0
        %v2046 = vadd.f32 %v1957, %v2045
        %v2047 = vpop.f32.mrb[0].mxu0
        %2048 = vdwg.mxu0
        %2049 = vmatprep.subr.mxu0 0.0
        %v2050 = vand.u32 %v1598, 4294901760
        %v2051 = vsub.f32 %v1598, %v2050
        %v2052 = vand.u32 %v2051, 4294901760
        %2053 = vmatpush1.msra.mxu0 %v2052
        %2054 = vmatprep.subr.mxu0 0.0
        %v2055 = vand.u32 %v1599, 4294901760
        %v2056 = vsub.f32 %v1599, %v2055
        %v2057 = vand.u32 %v2056, 4294901760
        %2058 = vmatpush1.msra.mxu0 %v2057
        %2059 = vmatprep.subr.mxu0 0.0
        %v2060 = vand.u32 %v1600, 4294901760
        %v2061 = vsub.f32 %v1600, %v2060
        %v2062 = vand.u32 %v2061, 4294901760
        %2063 = vmatpush1.msra.mxu0 %v2062
        %2064 = vmatprep.subr.mxu0 0.0
        %v2065 = vand.u32 %v1601, 4294901760
        %v2066 = vsub.f32 %v1601, %v2065
        %v2067 = vand.u32 %v2066, 4294901760
        %2068 = vmatpush1.msra.mxu0 %v2067
        %2069 = vmatprep.subr.mxu0 0.0
        %v2070 = vand.u32 %v1602, 4294901760
        %v2071 = vsub.f32 %v1602, %v2070
        %v2072 = vand.u32 %v2071, 4294901760
        %2073 = vmatpush1.msra.mxu0 %v2072
        %2074 = vmatprep.subr.mxu0 0.0
        %v2075 = vand.u32 %v1603, 4294901760
        %v2076 = vsub.f32 %v1603, %v2075
        %v2077 = vand.u32 %v2076, 4294901760
        %2078 = vmatpush1.msra.mxu0 %v2077
        %2079 = vmatprep.subr.mxu0 0.0
        %v2080 = vand.u32 %v1604, 4294901760
        %v2081 = vsub.f32 %v1604, %v2080
        %v2082 = vand.u32 %v2081, 4294901760
        %2083 = vmatpush1.msra.mxu0 %v2082
        %2084 = vmatprep.subr.mxu0 0.0
        %v2085 = vand.u32 %v1605, 4294901760
        %v2086 = vsub.f32 %v1605, %v2085
        %v2087 = vand.u32 %v2086, 4294901760
        %2088 = vmatpush1.msra.mxu0 %v2087
        %2089 = vmatprep.subr.mxu0 0.0
        %v2090 = vand.u32 %v1606, 4294901760
        %v2091 = vsub.f32 %v1606, %v2090
        %v2092 = vand.u32 %v2091, 4294901760
        %2093 = vmatpush1.msra.mxu0 %v2092
        %2094 = vmatprep.subr.mxu0 0.0
        %v2095 = vand.u32 %v1607, 4294901760
        %v2096 = vsub.f32 %v1607, %v2095
        %v2097 = vand.u32 %v2096, 4294901760
        %2098 = vmatpush1.msra.mxu0 %v2097
        %2099 = vmatprep.subr.mxu0 0.0
        %v2100 = vand.u32 %v1608, 4294901760
        %v2101 = vsub.f32 %v1608, %v2100
        %v2102 = vand.u32 %v2101, 4294901760
        %2103 = vmatpush1.msra.mxu0 %v2102
        %2104 = vmatprep.subr.mxu0 0.0
        %v2105 = vand.u32 %v1609, 4294901760
        %v2106 = vsub.f32 %v1609, %v2105
        %v2107 = vand.u32 %v2106, 4294901760
        %2108 = vmatpush1.msra.mxu0 %v2107
        %2109 = vmatprep.subr.mxu0 0.0
        %v2110 = vand.u32 %v1610, 4294901760
        %v2111 = vsub.f32 %v1610, %v2110
        %v2112 = vand.u32 %v2111, 4294901760
        %2113 = vmatpush1.msra.mxu0 %v2112
        %2114 = vmatprep.subr.mxu0 0.0
        %v2115 = vand.u32 %v1611, 4294901760
        %v2116 = vsub.f32 %v1611, %v2115
        %v2117 = vand.u32 %v2116, 4294901760
        %2118 = vmatpush1.msra.mxu0 %v2117
        %2119 = vmatprep.subr.mxu0 0.0
        %v2120 = vand.u32 %v1612, 4294901760
        %v2121 = vsub.f32 %v1612, %v2120
        %v2122 = vand.u32 %v2121, 4294901760
        %2123 = vmatpush1.msra.mxu0 %v2122
        %2124 = vmatprep.subr.mxu0 0.0
        %v2125 = vand.u32 %v1613, 4294901760
        %v2126 = vsub.f32 %v1613, %v2125
        %v2127 = vand.u32 %v2126, 4294901760
        %2128 = vmatpush1.msra.mxu0 %v2127
        %2129 = vmatprep.subr.mxu0 0.0
        %2130 = vmatpush1.msra.mxu0 0.0
        %2131 = vmatprep.subr.mxu0 0.0
        %2132 = vmatpush1.msra.mxu0 0.0
        %2133 = vmatprep.subr.mxu0 0.0
        %2134 = vmatpush1.msra.mxu0 0.0
        %2135 = vmatprep.subr.mxu0 0.0
        %2136 = vmatpush1.msra.mxu0 0.0
        %2137 = vmatprep.subr.mxu0 0.0
        %2138 = vmatpush1.msra.mxu0 0.0
        %2139 = vmatprep.subr.mxu0 0.0
        %2140 = vmatpush1.msra.mxu0 0.0
        %2141 = vmatprep.subr.mxu0 0.0
        %2142 = vmatpush1.msra.mxu0 0.0
        %2143 = vmatprep.subr.mxu0 0.0
        %2144 = vmatpush1.msra.mxu0 0.0
        %2145 = vmatprep.subr.mxu0 0.0
        %2146 = vmatpush1.msra.mxu0 0.0
        %2147 = vmatprep.subr.mxu0 0.0
        %2148 = vmatpush1.msra.mxu0 0.0
        %2149 = vmatprep.subr.mxu0 0.0
        %2150 = vmatpush1.msra.mxu0 0.0
        %2151 = vmatprep.subr.mxu0 0.0
        %2152 = vmatpush1.msra.mxu0 0.0
        %2153 = vmatprep.subr.mxu0 0.0
        %2154 = vmatpush1.msra.mxu0 0.0
        %2155 = vmatprep.subr.mxu0 0.0
        %2156 = vmatpush1.msra.mxu0 0.0
        %2157 = vmatprep.subr.mxu0 0.0
        %2158 = vmatpush1.msra.mxu0 0.0
        %2159 = vmatprep.subr.mxu0 0.0
        %2160 = vmatpush1.msra.mxu0 0.0
        %2161 = vmatprep.mubr.f32.mxu0 0.0
        %v2162 = vand.u32 %v1597, 4294901760
        %2163 = vmatmul.mubr.f32.gmra.mrb[0].mxu0 %v2162
        %v2164 = vpop.f32.mrb[0].mxu0
        %v2165 = vadd.f32 %v2046, %v2164
        %v2166 = vpop.f32.mrb[0].mxu0
        %2167 = vdwg.mxu0
        %2168 = vmatprep.subr.mxu0 0.0
        %v2169 = vand.u32 %v1598, 4294901760
        %2170 = vmatpush1.msra.mxu0 %v2169
        %2171 = vmatprep.subr.mxu0 0.0
        %v2172 = vand.u32 %v1599, 4294901760
        %2173 = vmatpush1.msra.mxu0 %v2172
        %2174 = vmatprep.subr.mxu0 0.0
        %v2175 = vand.u32 %v1600, 4294901760
        %2176 = vmatpush1.msra.mxu0 %v2175
        %2177 = vmatprep.subr.mxu0 0.0
        %v2178 = vand.u32 %v1601, 4294901760
        %2179 = vmatpush1.msra.mxu0 %v2178
        %2180 = vmatprep.subr.mxu0 0.0
        %v2181 = vand.u32 %v1602, 4294901760
        %2182 = vmatpush1.msra.mxu0 %v2181
        %2183 = vmatprep.subr.mxu0 0.0
        %v2184 = vand.u32 %v1603, 4294901760
        %2185 = vmatpush1.msra.mxu0 %v2184
        %2186 = vmatprep.subr.mxu0 0.0
        %v2187 = vand.u32 %v1604, 4294901760
        %2188 = vmatpush1.msra.mxu0 %v2187
        %2189 = vmatprep.subr.mxu0 0.0
        %v2190 = vand.u32 %v1605, 4294901760
        %2191 = vmatpush1.msra.mxu0 %v2190
        %2192 = vmatprep.subr.mxu0 0.0
        %v2193 = vand.u32 %v1606, 4294901760
        %2194 = vmatpush1.msra.mxu0 %v2193
        %2195 = vmatprep.subr.mxu0 0.0
        %v2196 = vand.u32 %v1607, 4294901760
        %2197 = vmatpush1.msra.mxu0 %v2196
        %2198 = vmatprep.subr.mxu0 0.0
        %v2199 = vand.u32 %v1608, 4294901760
        %2200 = vmatpush1.msra.mxu0 %v2199
        %2201 = vmatprep.subr.mxu0 0.0
        %v2202 = vand.u32 %v1609, 4294901760
        %2203 = vmatpush1.msra.mxu0 %v2202
        %2204 = vmatprep.subr.mxu0 0.0
        %v2205 = vand.u32 %v1610, 4294901760
        %2206 = vmatpush1.msra.mxu0 %v2205
        %2207 = vmatprep.subr.mxu0 0.0
        %v2208 = vand.u32 %v1611, 4294901760
        %2209 = vmatpush1.msra.mxu0 %v2208
        %2210 = vmatprep.subr.mxu0 0.0
        %v2211 = vand.u32 %v1612, 4294901760
        %2212 = vmatpush1.msra.mxu0 %v2211
        %2213 = vmatprep.subr.mxu0 0.0
        %v2214 = vand.u32 %v1613, 4294901760
        %2215 = vmatpush1.msra.mxu0 %v2214
        %2216 = vmatprep.subr.mxu0 0.0
        %2217 = vmatpush1.msra.mxu0 0.0
        %2218 = vmatprep.subr.mxu0 0.0
        %2219 = vmatpush1.msra.mxu0 0.0
        %2220 = vmatprep.subr.mxu0 0.0
        %2221 = vmatpush1.msra.mxu0 0.0
        %2222 = vmatprep.subr.mxu0 0.0
        %2223 = vmatpush1.msra.mxu0 0.0
        %2224 = vmatprep.subr.mxu0 0.0
        %2225 = vmatpush1.msra.mxu0 0.0
        %2226 = vmatprep.subr.mxu0 0.0
        %2227 = vmatpush1.msra.mxu0 0.0
        %2228 = vmatprep.subr.mxu0 0.0
        %2229 = vmatpush1.msra.mxu0 0.0
        %2230 = vmatprep.subr.mxu0 0.0
        %2231 = vmatpush1.msra.mxu0 0.0
        %2232 = vmatprep.subr.mxu0 0.0
        %2233 = vmatpush1.msra.mxu0 0.0
        %2234 = vmatprep.subr.mxu0 0.0
        %2235 = vmatpush1.msra.mxu0 0.0
        %2236 = vmatprep.subr.mxu0 0.0
        %2237 = vmatpush1.msra.mxu0 0.0
        %2238 = vmatprep.subr.mxu0 0.0
        %2239 = vmatpush1.msra.mxu0 0.0
        %2240 = vmatprep.subr.mxu0 0.0
        %2241 = vmatpush1.msra.mxu0 0.0
        %2242 = vmatprep.subr.mxu0 0.0
        %2243 = vmatpush1.msra.mxu0 0.0
        %2244 = vmatprep.subr.mxu0 0.0
        %2245 = vmatpush1.msra.mxu0 0.0
        %2246 = vmatprep.subr.mxu0 0.0
        %2247 = vmatpush1.msra.mxu0 0.0
        %2248 = vmatprep.mubr.f32.mxu0 0.0
        %v2249 = vand.u32 %v1597, 4294901760
        %2250 = vmatmul.mubr.f32.gmra.mrb[0].mxu0 %v2249
        %v2251 = vpop.f32.mrb[0].mxu0
        %v2252 = vadd.f32 %v2165, %v2251
        %v2253 = vpop.f32.mrb[0].mxu0
        %2254 = vdwg.mxu0
        %v2255 = vadd.f32 %v1594, %v2252
        %2256 = vst [vmem:[%s274] sm:$0xff] %v2255
        %2257 = vst [vmem:[#allocation2] sm:$0xff] %v281
        %2258 = vst [vmem:[#allocation3] sm:$0xff] %v2255
        %s2259 = sand.u32 %s136, 1
        %s2260 = scalar_lea.sflag [#allocation6], %s2259
        %s2261 = sand.u32 %s136, 1
        %s2262 = smul.addr %s2261, 8
        %s2263 = scalar_lea.vmem [#allocation12], %s2262
        // Predicated region
        $region57: #{tpu_custom_call.1} parent=35 // pred_check
          %p2264 = pneg %p146
        $region58: #{tpu_custom_call.1} parent=35 // pred_check_branch
          %2266 = sbr.rel (%p2264) target = $region60
        $region59: #{tpu_custom_call.1} parent=35 // pred_region
          %s2268 = ssub.s32 128, 128
          %2269 = vsyncadd %s2260, %s2268
          %s2270 = smul.addr %s27, 4
          %s2271 = sadd.s32 %s28, %s2270
          %s2272 = smul.addr %s2271, 128
          %s2273 = scalar_lea.hbm %s4, %s2272
          %s2275 = sshll.u32 %s2263, 4
          %s2276 = int_to_ptr.vmem [resolvable:$true] %s2275
          %2278 = dma.vmem_to_hbm [thread:$0]  %s2276, 128, %s2273, %s2260
        $region60: #{tpu_custom_call.1} parent=35 // pred_fallthru
          _
      $region36: #{tpu_custom_call.1} parent=5 // pred_fallthru
        _
      %p2279 = scmp.le.s32.totalorder 2, %s18
      // Predicated region
      $region61: #{tpu_custom_call.1} parent=5 // pred_check
        %p2280 = pneg %p2279
      $region62: #{tpu_custom_call.1} parent=5 // pred_check_branch
        %2282 = sbr.rel (%p2280) target = $region64
      $region63: #{tpu_custom_call.1} parent=5 // pred_region
        %s2283 = ssub.s32 %s18, 2
        // Predicated region
        $region65: #{tpu_custom_call.1} parent=63 // pred_check
          %p2284 = pneg %p152
        $region66: #{tpu_custom_call.1} parent=63 // pred_check_branch
          %2286 = sbr.rel (%p2284) target = $region68
        $region67: #{tpu_custom_call.1} parent=63 // pred_region
          %s2287 = sand.u32 %s137, 1
          %s2288 = scalar_lea.sflag [#allocation6], %s2287
          %s2289 = sand.u32 %s137, 1
          %s2290 = smul.addr %s2289, 8
          %s2291 = scalar_lea.vmem [#allocation12], %s2290
          %2292 = dma.done %s2288, 128
        $region68: #{tpu_custom_call.1} parent=63 // pred_fallthru
          _
      $region64: #{tpu_custom_call.1} parent=5 // pred_fallthru
        _
    $region6: #{tpu_custom_call.1} parent=1 // loop_footer
      %s22 = sadd.s32 1, %s18
    $region7: #{tpu_custom_call.1} parent=1 // loop_footer_branch
      %17 = sbr.rel target = $region3
    $region8: #{tpu_custom_call.1} parent=1 // loop_exit
      _
    %2293 = vsyncpa [#allocation5], 1
    %s2294 = scalar_lea.sflag [#allocation5], 1
    %2295 = vsyncpa %s2294, 1
    %2296 = vsyncpa [#allocation8], 1
    %2297 = vsyncpa [#allocation11], 1
    %2298 = vsyncpa [#allocation6], 1
    %s2299 = scalar_lea.sflag [#allocation6], 1
    %2300 = vsyncpa %s2299, 1

</llo_original>
